<compile_context>
chip_gen: v6e
topology: v6e:2x2x1
jax: 0.10.0
libtpu: 0.0.40
codegen_flags: <defaults>
</compile_context>

<pallas_src>
import functools

import jax
import jax.numpy as jnp
from jax import lax
from jax.experimental import pallas as pl
from jax.experimental.pallas import tpu as pltpu


# ----------------------------- Pallas kernel --------------------------------
def block_kernel(xf_ref, xq_ref, ln1g_ref, ln1b_ref,
                 wq_ref, wk_ref, wv_ref, wp3_ref, bproj_ref,
                 ln2g_ref, ln2b_ref, w1_ref, b1_ref, w2_ref, b2_ref,
                 out_ref, k3_ref, v3_ref, *, num_heads):
    eps = 1e-6
    H = num_heads
    xq = xq_ref[0]                                  # (TQ, C) f32 query tile
    TQ, C = xq.shape
    Dh = C // H
    scale = Dh ** (-0.5)

    # hoist LN1 affine params (used for both the K/V pass and the Q pass)
    ln1g = ln1g_ref[...]                            # (1, C)
    ln1b = ln1b_ref[...]

    def layernorm(v, g, b):                         # f32 statistics
        mu = jnp.mean(v, axis=-1, keepdims=True)
        var = jnp.mean((v - mu) ** 2, axis=-1, keepdims=True)
        return (v - mu) * lax.rsqrt(var + eps) * g + b

    def split_heads(t):                             # (n, C) -> (H, n, Dh)
        return jnp.concatenate(
            [t[None, :, h * Dh:(h + 1) * Dh] for h in range(H)], axis=0)

    # ---- K / V for the whole batch element: computed once per b ------------
    @pl.when(pl.program_id(1) == 0)
    def _():
        xf = xf_ref[0]                              # (N, C) f32, full tokens
        xfn = layernorm(xf, ln1g, ln1b).astype(jnp.bfloat16)
        k = jnp.dot(xfn, wk_ref[...], preferred_element_type=jnp.float32)
        v = jnp.dot(xfn, wv_ref[...], preferred_element_type=jnp.float32)
        k3_ref[...] = split_heads(k).astype(jnp.bfloat16)   # (H, N, Dh)
        v3_ref[...] = split_heads(v).astype(jnp.bfloat16)

    # ---- Attention for this query tile (heads batched on the MXU) ----------
    xqn = layernorm(xq, ln1g, ln1b).astype(jnp.bfloat16)
    q = jnp.dot(xqn, wq_ref[...], preferred_element_type=jnp.float32) * scale
    q3 = split_heads(q).astype(jnp.bfloat16)                 # (H, TQ, Dh)

    s = jnp.einsum('hqd,hkd->hqk', q3, k3_ref[...],
                   preferred_element_type=jnp.float32)       # (H, TQ, N)
    s = s - jnp.max(s, axis=-1, keepdims=True)
    p = jnp.exp(s)
    denom = jnp.sum(p, axis=-1, keepdims=True)
    p = p * pl.reciprocal(denom, approx=True)                # EUP, not VALU div
    o3 = jnp.einsum('hqk,hkd->hqd', p.astype(jnp.bfloat16), v3_ref[...],
                    preferred_element_type=jnp.float32)      # (H, TQ, Dh)

    # fused output projection: sum_h o3[h] @ Wproj[h]  (no head concat)
    proj = jnp.einsum('hqd,hdc->hqc', o3.astype(jnp.bfloat16), wp3_ref[...],
                      preferred_element_type=jnp.float32)    # (H, TQ, C)
    attn_out = jnp.sum(proj, axis=0) + bproj_ref[...]

    x1 = xq + attn_out                                       # residual 1 (f32)

    # ---- LayerNorm 2 + MLP (Linear -> exact erf GELU -> Linear) ------------
    x2n = layernorm(x1, ln2g_ref[...], ln2b_ref[...]).astype(jnp.bfloat16)
    h1 = jnp.dot(x2n, w1_ref[...],
                 preferred_element_type=jnp.float32) + b1_ref[...]
    h1 = 0.5 * h1 * (1.0 + lax.erf(h1 * 0.7071067811865476))   # nn.GELU (erf)
    h2 = jnp.dot(h1.astype(jnp.bfloat16), w2_ref[...],
                 preferred_element_type=jnp.float32) + b2_ref[...]

    out_ref[0] = x1 + h2                                      # residual 2


# ------------------------------ wrapper --------------------------------------
def block_forward(x, params, num_heads, q_tile=128):
    B, N, C = x.shape
    Dh = C // num_heads
    hidden = params["w1"].shape[1]

    tq = min(q_tile, N)
    assert N % tq == 0, "token count must be divisible by the query tile"
    nq = N // tq

    # host-side (free) reshape of the projection weight to per-head form
    wproj3 = params["wproj"].reshape(num_heads, Dh, C)

    def const_spec(shape):
        return pl.BlockSpec(shape, lambda b, qi: (0,) * len(shape))

    in_specs = [
        pl.BlockSpec((1, N, C), lambda b, qi: (b, 0, 0)),    # x (full, K/V src)
        pl.BlockSpec((1, tq, C), lambda b, qi: (b, qi, 0)),  # x (query tile)
        const_spec((1, C)), const_spec((1, C)),              # ln1 gamma/beta
        const_spec((C, C)), const_spec((C, C)), const_spec((C, C)),  # wq wk wv
        const_spec((num_heads, Dh, C)),                      # wproj (per head)
        const_spec((1, C)),                                  # bproj
        const_spec((1, C)), const_spec((1, C)),              # ln2 gamma/beta
        const_spec((C, hidden)), const_spec((1, hidden)),    # w1, b1
        const_spec((hidden, C)), const_spec((1, C)),         # w2, b2
    ]
    out_specs = pl.BlockSpec((1, tq, C), lambda b, qi: (b, qi, 0))

    kernel = functools.partial(block_kernel, num_heads=num_heads)
    return pl.pallas_call(
        kernel,
        out_shape=jax.ShapeDtypeStruct((B, N, C), jnp.float32),
        grid=(B, nq),
        in_specs=in_specs,
        out_specs=out_specs,
        scratch_shapes=[
            pltpu.VMEM((num_heads, N, Dh), jnp.bfloat16),    # K, per head
            pltpu.VMEM((num_heads, N, Dh), jnp.bfloat16),    # V, per head
        ],
        compiler_params=pltpu.CompilerParams(
            dimension_semantics=("parallel", "arbitrary"),
            # raise for real ViT dims / v6e; keep modest & portable here
            vmem_limit_bytes=32 * 1024 * 1024),
    )(x, x,
      params["ln1_g"], params["ln1_b"],
      params["wq"], params["wk"], params["wv"],
      wproj3, params["bproj"],
      params["ln2_g"], params["ln2_b"],
      params["w1"], params["b1"], params["w2"], params["b2"])


# --------------------------- parameter init -----------------------------------
def xavier_uniform(key, out_f, in_f):
    # torch.nn.init.xavier_uniform_ on a (out, in) Linear weight
    bound = (6.0 / (in_f + out_f)) ** 0.5
    return jax.random.uniform(key, (out_f, in_f), jnp.float32, -bound, bound)


def make_params(key, dim, num_heads, mlp_ratio):
    hidden = int(dim * mlp_ratio)
    k1, k2, k3, k4 = jax.random.split(key, 4)
    # qkv weight drawn jointly like torch's (3C, C) Linear, then split;
    # matmul weights stored bf16 (halves VMEM, enables bf16 MXU path)
    wqkv_t = xavier_uniform(k1, 3 * dim, dim).T.astype(jnp.bfloat16)  # (C, 3C)
    return {
        # LayerNorm: weight=1, bias=0 (torch default), kept in f32
        "ln1_g": jnp.ones((1, dim), jnp.float32),
        "ln1_b": jnp.zeros((1, dim), jnp.float32),
        "ln2_g": jnp.ones((1, dim), jnp.float32),
        "ln2_b": jnp.zeros((1, dim), jnp.float32),
        # Attention (qkv_bias=False); pre-transposed to (in, out)
        "wq": wqkv_t[:, 0:dim],
        "wk": wqkv_t[:, dim:2 * dim],
        "wv": wqkv_t[:, 2 * dim:3 * dim],
        "wproj": xavier_uniform(k2, dim, dim).T.astype(jnp.bfloat16),  # (C, C)
        "bproj": jnp.zeros((1, dim), jnp.float32),
        # MLP
        "w1": xavier_uniform(k3, hidden, dim).T.astype(jnp.bfloat16),  # (C, H)
        "b1": jnp.zeros((1, hidden), jnp.float32),
        "w2": xavier_uniform(k4, dim, hidden).T.astype(jnp.bfloat16),  # (H, C)
        "b2": jnp.zeros((1, dim), jnp.float32),
    }


# --------------------------- pure-JAX reference --------------------------------
def block_reference(x, p, num_heads):
    B, N, C = x.shape
    Dh = C // num_heads
    f32 = lambda a: a.astype(jnp.float32)

    def ln(v, g, b):
        mu = jnp.mean(v, axis=-1, keepdims=True)
        var = jnp.mean((v - mu) ** 2, axis=-1, keepdims=True)
        return (v - mu) * lax.rsqrt(var + 1e-6) * g + b

    xn = ln(x, p["ln1_g"][0], p["ln1_b"][0])
    q = (xn @ f32(p["wq"])).reshape(B, N, num_heads, Dh).transpose(0, 2, 1, 3)
    k = (xn @ f32(p["wk"])).reshape(B, N, num_heads, Dh).transpose(0, 2, 1, 3)
    v = (xn @ f32(p["wv"])).reshape(B, N, num_heads, Dh).transpose(0, 2, 1, 3)
    att = jax.nn.softmax((q @ jnp.swapaxes(k, -2, -1)) * (Dh ** -0.5), axis=-1)
    o = (att @ v).transpose(0, 2, 1, 3).reshape(B, N, C)
    x1 = x + (o @ f32(p["wproj"]) + p["bproj"][0])

    x2n = ln(x1, p["ln2_g"][0], p["ln2_b"][0])
    h = jax.nn.gelu(x2n @ f32(p["w1"]) + p["b1"][0], approximate=False)
    return x1 + (h @ f32(p["w2"]) + p["b2"][0])


# ------------------------------------ main -------------------------------------
if __name__ == "__main__":
    B, N, C = 2, 16, 32
    num_heads, mlp_ratio = 4, 4
    q_tile = 8                      # N=16 -> 2 query tiles per batch element

    key = jax.random.PRNGKey(0)
    kx, kp = jax.random.split(key)
    x = jax.random.normal(kx, (B, N, C), jnp.float32)
    params = make_params(kp, C, num_heads, mlp_ratio)

    out = block_forward(x, params, num_heads, q_tile=q_tile)
    out = jax.block_until_ready(out)

    ref = block_reference(x, params, num_heads)
    assert out.shape == (B, N, C)
    # bf16 matmul operands + approx reciprocal -> loose-but-meaningful tolerance
    assert jnp.allclose(out, ref, atol=1e-1, rtol=1e-1), (
        float(jnp.max(jnp.abs(out - ref))))

    print("KERNEL_OK")
</pallas_src>

<mosaic_0001>
module attributes {stable_mosaic.version = 11 : i64} {
  func.func @block_kernel(%arg0: i32, %arg1: i32, %arg2: memref<1x16x32xf32, #tpu.memory_space<vmem>>, %arg3: memref<1x8x32xf32, #tpu.memory_space<vmem>>, %arg4: memref<1x32xf32, #tpu.memory_space<vmem>>, %arg5: memref<1x32xf32, #tpu.memory_space<vmem>>, %arg6: memref<32x32xbf16, #tpu.memory_space<vmem>>, %arg7: memref<32x32xbf16, #tpu.memory_space<vmem>>, %arg8: memref<32x32xbf16, #tpu.memory_space<vmem>>, %arg9: memref<4x8x32xbf16, #tpu.memory_space<vmem>>, %arg10: memref<1x32xf32, #tpu.memory_space<vmem>>, %arg11: memref<1x32xf32, #tpu.memory_space<vmem>>, %arg12: memref<1x32xf32, #tpu.memory_space<vmem>>, %arg13: memref<32x128xbf16, #tpu.memory_space<vmem>>, %arg14: memref<1x128xf32, #tpu.memory_space<vmem>>, %arg15: memref<128x32xbf16, #tpu.memory_space<vmem>>, %arg16: memref<1x32xf32, #tpu.memory_space<vmem>>, %arg17: memref<1x8x32xf32, #tpu.memory_space<vmem>>, %arg18: memref<4x16x8xbf16, #tpu.memory_space<vmem>>, %arg19: memref<4x16x8xbf16, #tpu.memory_space<vmem>>) attributes {dimension_semantics = [#tpu.dimension_semantics<parallel>, #tpu.dimension_semantics<arbitrary>], iteration_bounds = array<i64: 2, 2>, scalar_prefetch = 0 : i64, scratch_operands = 2 : i64, tpu.core_type = #tpu.core_type<tc>, window_params = [{transform_indices = @transform_0, window_bounds = array<i64: 1, 16, 32>}, {transform_indices = @transform_1, window_bounds = array<i64: 1, 8, 32>}, {pipeline_mode = #tpu.pipeline_mode<synchronous>, transform_indices = @transform_2, window_bounds = array<i64: 1, 32>}, {pipeline_mode = #tpu.pipeline_mode<synchronous>, transform_indices = @transform_3, window_bounds = array<i64: 1, 32>}, {pipeline_mode = #tpu.pipeline_mode<synchronous>, transform_indices = @transform_4, window_bounds = array<i64: 32, 32>}, {pipeline_mode = #tpu.pipeline_mode<synchronous>, transform_indices = @transform_5, window_bounds = array<i64: 32, 32>}, {pipeline_mode = #tpu.pipeline_mode<synchronous>, transform_indices = @transform_6, window_bounds = array<i64: 32, 32>}, {pipeline_mode = #tpu.pipeline_mode<synchronous>, transform_indices = @transform_7, window_bounds = array<i64: 4, 8, 32>}, {pipeline_mode = #tpu.pipeline_mode<synchronous>, transform_indices = @transform_8, window_bounds = array<i64: 1, 32>}, {pipeline_mode = #tpu.pipeline_mode<synchronous>, transform_indices = @transform_9, window_bounds = array<i64: 1, 32>}, {pipeline_mode = #tpu.pipeline_mode<synchronous>, transform_indices = @transform_10, window_bounds = array<i64: 1, 32>}, {pipeline_mode = #tpu.pipeline_mode<synchronous>, transform_indices = @transform_11, window_bounds = array<i64: 32, 128>}, {pipeline_mode = #tpu.pipeline_mode<synchronous>, transform_indices = @transform_12, window_bounds = array<i64: 1, 128>}, {pipeline_mode = #tpu.pipeline_mode<synchronous>, transform_indices = @transform_13, window_bounds = array<i64: 128, 32>}, {pipeline_mode = #tpu.pipeline_mode<synchronous>, transform_indices = @transform_14, window_bounds = array<i64: 1, 32>}, {transform_indices = @transform_15, window_bounds = array<i64: 1, 8, 32>}]} {
    %c0 = arith.constant 0 : index
    %c0_0 = arith.constant 0 : index
    %c0_1 = arith.constant 0 : index
    %0 = vector.load %arg3[%c0, %c0_0, %c0_1] : memref<1x8x32xf32, #tpu.memory_space<vmem>>, vector<1x8x32xf32>
    %1 = vector.shape_cast %0 : vector<1x8x32xf32> to vector<8x32xf32>
    %c0_2 = arith.constant 0 : index
    %c0_3 = arith.constant 0 : index
    %2 = vector.load %arg4[%c0_2, %c0_3] : memref<1x32xf32, #tpu.memory_space<vmem>>, vector<1x32xf32>
    %c0_4 = arith.constant 0 : index
    %c0_5 = arith.constant 0 : index
    %3 = vector.load %arg5[%c0_4, %c0_5] : memref<1x32xf32, #tpu.memory_space<vmem>>, vector<1x32xf32>
    %c0_i32 = arith.constant 0 : i32
    %4 = arith.cmpi eq, %arg1, %c0_i32 : i32
    %5 = arith.extui %4 : i1 to i32
    %c0_i32_6 = arith.constant 0 : i32
    %6 = arith.cmpi ne, %5, %c0_i32_6 : i32
    scf.if %6 {
      %c0_57 = arith.constant 0 : index
      %c0_58 = arith.constant 0 : index
      %c0_59 = arith.constant 0 : index
      %115 = vector.load %arg2[%c0_57, %c0_58, %c0_59] : memref<1x16x32xf32, #tpu.memory_space<vmem>>, vector<1x16x32xf32>
      %116 = vector.shape_cast %115 : vector<1x16x32xf32> to vector<16x32xf32>
      %cst_60 = arith.constant dense<0.000000e+00> : vector<16xf32>
      %117 = vector.multi_reduction <add>, %116, %cst_60 [1] : vector<16x32xf32> to vector<16xf32>
      %118 = vector.shape_cast %117 : vector<16xf32> to vector<16x1xf32>
      %cst_61 = arith.constant 3.200000e+01 : f32
      %119 = vector.broadcast %cst_61 : f32 to vector<16x1xf32>
      %120 = arith.divf %118, %119 : vector<16x1xf32>
      %121 = vector.broadcast %120 : vector<16x1xf32> to vector<16x32xf32>
      %122 = arith.subf %116, %121 : vector<16x32xf32>
      %123 = arith.mulf %122, %122 : vector<16x32xf32>
      %cst_62 = arith.constant dense<0.000000e+00> : vector<16xf32>
      %124 = vector.multi_reduction <add>, %123, %cst_62 [1] : vector<16x32xf32> to vector<16xf32>
      %125 = vector.shape_cast %124 : vector<16xf32> to vector<16x1xf32>
      %cst_63 = arith.constant 3.200000e+01 : f32
      %126 = vector.broadcast %cst_63 : f32 to vector<16x1xf32>
      %127 = arith.divf %125, %126 : vector<16x1xf32>
      %128 = vector.broadcast %120 : vector<16x1xf32> to vector<16x32xf32>
      %129 = arith.subf %116, %128 : vector<16x32xf32>
      %cst_64 = arith.constant 9.99999997E-7 : f32
      %130 = vector.broadcast %cst_64 : f32 to vector<16x1xf32>
      %131 = arith.addf %127, %130 : vector<16x1xf32>
      %132 = math.rsqrt %131 : vector<16x1xf32>
      %133 = vector.broadcast %132 : vector<16x1xf32> to vector<16x32xf32>
      %134 = arith.mulf %129, %133 : vector<16x32xf32>
      %135 = vector.broadcast %2 : vector<1x32xf32> to vector<16x32xf32>
      %136 = arith.mulf %134, %135 : vector<16x32xf32>
      %137 = vector.broadcast %3 : vector<1x32xf32> to vector<16x32xf32>
      %138 = arith.addf %136, %137 : vector<16x32xf32>
      %139 = arith.truncf %138 : vector<16x32xf32> to vector<16x32xbf16>
      %c0_65 = arith.constant 0 : index
      %c0_66 = arith.constant 0 : index
      %140 = vector.load %arg7[%c0_65, %c0_66] : memref<32x32xbf16, #tpu.memory_space<vmem>>, vector<32x32xbf16>
      %cst_67 = arith.constant dense<0.000000e+00> : vector<16x32xf32>
      %141 = tpu.matmul %139, %140, %cst_67 {dimension_numbers = #tpu.dot_dimension_numbers<[1], [0], [0], [1], [0, 0, 1, 1], [], []>} : vector<16x32xbf16>, vector<32x32xbf16>, vector<16x32xf32> -> vector<16x32xf32>
      %c0_68 = arith.constant 0 : index
      %c0_69 = arith.constant 0 : index
      %142 = vector.load %arg8[%c0_68, %c0_69] : memref<32x32xbf16, #tpu.memory_space<vmem>>, vector<32x32xbf16>
      %cst_70 = arith.constant dense<0.000000e+00> : vector<16x32xf32>
      %143 = tpu.matmul %139, %142, %cst_70 {dimension_numbers = #tpu.dot_dimension_numbers<[1], [0], [0], [1], [0, 0, 1, 1], [], []>} : vector<16x32xbf16>, vector<32x32xbf16>, vector<16x32xf32> -> vector<16x32xf32>
      %144 = vector.extract_strided_slice %141 {offsets = [0, 0], sizes = [16, 8], strides = [1, 1]} : vector<16x32xf32> to vector<16x8xf32>
      %145 = vector.shape_cast %144 : vector<16x8xf32> to vector<1x16x8xf32>
      %146 = vector.extract_strided_slice %141 {offsets = [0, 8], sizes = [16, 8], strides = [1, 1]} : vector<16x32xf32> to vector<16x8xf32>
      %147 = vector.shape_cast %146 : vector<16x8xf32> to vector<1x16x8xf32>
      %148 = vector.extract_strided_slice %141 {offsets = [0, 16], sizes = [16, 8], strides = [1, 1]} : vector<16x32xf32> to vector<16x8xf32>
      %149 = vector.shape_cast %148 : vector<16x8xf32> to vector<1x16x8xf32>
      %150 = vector.extract_strided_slice %141 {offsets = [0, 24], sizes = [16, 8], strides = [1, 1]} : vector<16x32xf32> to vector<16x8xf32>
      %151 = vector.shape_cast %150 : vector<16x8xf32> to vector<1x16x8xf32>
      %152 = tpu.concatenate %145, %147, %149, %151 in 0 : vector<1x16x8xf32>, vector<1x16x8xf32>, vector<1x16x8xf32>, vector<1x16x8xf32> -> vector<4x16x8xf32>
      %153 = arith.truncf %152 : vector<4x16x8xf32> to vector<4x16x8xbf16>
      %c0_71 = arith.constant 0 : index
      %c0_72 = arith.constant 0 : index
      %c0_73 = arith.constant 0 : index
      %154 = vector.load %arg18[%c0_71, %c0_72, %c0_73] : memref<4x16x8xbf16, #tpu.memory_space<vmem>>, vector<4x16x8xbf16>
      tpu.vector_store %arg18[%c0_71, %c0_72, %c0_73], %153 {strides = array<i32>} : memref<4x16x8xbf16, #tpu.memory_space<vmem>>, vector<4x16x8xbf16>,
      %155 = vector.extract_strided_slice %143 {offsets = [0, 0], sizes = [16, 8], strides = [1, 1]} : vector<16x32xf32> to vector<16x8xf32>
      %156 = vector.shape_cast %155 : vector<16x8xf32> to vector<1x16x8xf32>
      %157 = vector.extract_strided_slice %143 {offsets = [0, 8], sizes = [16, 8], strides = [1, 1]} : vector<16x32xf32> to vector<16x8xf32>
      %158 = vector.shape_cast %157 : vector<16x8xf32> to vector<1x16x8xf32>
      %159 = vector.extract_strided_slice %143 {offsets = [0, 16], sizes = [16, 8], strides = [1, 1]} : vector<16x32xf32> to vector<16x8xf32>
      %160 = vector.shape_cast %159 : vector<16x8xf32> to vector<1x16x8xf32>
      %161 = vector.extract_strided_slice %143 {offsets = [0, 24], sizes = [16, 8], strides = [1, 1]} : vector<16x32xf32> to vector<16x8xf32>
      %162 = vector.shape_cast %161 : vector<16x8xf32> to vector<1x16x8xf32>
      %163 = tpu.concatenate %156, %158, %160, %162 in 0 : vector<1x16x8xf32>, vector<1x16x8xf32>, vector<1x16x8xf32>, vector<1x16x8xf32> -> vector<4x16x8xf32>
      %164 = arith.truncf %163 : vector<4x16x8xf32> to vector<4x16x8xbf16>
      %c0_74 = arith.constant 0 : index
      %c0_75 = arith.constant 0 : index
      %c0_76 = arith.constant 0 : index
      %165 = vector.load %arg19[%c0_74, %c0_75, %c0_76] : memref<4x16x8xbf16, #tpu.memory_space<vmem>>, vector<4x16x8xbf16>
      tpu.vector_store %arg19[%c0_74, %c0_75, %c0_76], %164 {strides = array<i32>} : memref<4x16x8xbf16, #tpu.memory_space<vmem>>, vector<4x16x8xbf16>,
    } else {
    }
    %cst = arith.constant dense<0.000000e+00> : vector<8xf32>
    %7 = vector.multi_reduction <add>, %1, %cst [1] : vector<8x32xf32> to vector<8xf32>
    %8 = vector.shape_cast %7 : vector<8xf32> to vector<8x1xf32>
    %cst_7 = arith.constant 3.200000e+01 : f32
    %9 = vector.broadcast %cst_7 : f32 to vector<8x1xf32>
    %10 = arith.divf %8, %9 : vector<8x1xf32>
    %11 = vector.broadcast %10 : vector<8x1xf32> to vector<8x32xf32>
    %12 = arith.subf %1, %11 : vector<8x32xf32>
    %13 = arith.mulf %12, %12 : vector<8x32xf32>
    %cst_8 = arith.constant dense<0.000000e+00> : vector<8xf32>
    %14 = vector.multi_reduction <add>, %13, %cst_8 [1] : vector<8x32xf32> to vector<8xf32>
    %15 = vector.shape_cast %14 : vector<8xf32> to vector<8x1xf32>
    %cst_9 = arith.constant 3.200000e+01 : f32
    %16 = vector.broadcast %cst_9 : f32 to vector<8x1xf32>
    %17 = arith.divf %15, %16 : vector<8x1xf32>
    %18 = vector.broadcast %10 : vector<8x1xf32> to vector<8x32xf32>
    %19 = arith.subf %1, %18 : vector<8x32xf32>
    %cst_10 = arith.constant 9.99999997E-7 : f32
    %20 = vector.broadcast %cst_10 : f32 to vector<8x1xf32>
    %21 = arith.addf %17, %20 : vector<8x1xf32>
    %22 = math.rsqrt %21 : vector<8x1xf32>
    %23 = vector.broadcast %22 : vector<8x1xf32> to vector<8x32xf32>
    %24 = arith.mulf %19, %23 : vector<8x32xf32>
    %25 = vector.broadcast %2 : vector<1x32xf32> to vector<8x32xf32>
    %26 = arith.mulf %24, %25 : vector<8x32xf32>
    %27 = vector.broadcast %3 : vector<1x32xf32> to vector<8x32xf32>
    %28 = arith.addf %26, %27 : vector<8x32xf32>
    %29 = arith.truncf %28 : vector<8x32xf32> to vector<8x32xbf16>
    %c0_11 = arith.constant 0 : index
    %c0_12 = arith.constant 0 : index
    %30 = vector.load %arg6[%c0_11, %c0_12] : memref<32x32xbf16, #tpu.memory_space<vmem>>, vector<32x32xbf16>
    %cst_13 = arith.constant dense<0.000000e+00> : vector<8x32xf32>
    %31 = tpu.matmul %29, %30, %cst_13 {dimension_numbers = #tpu.dot_dimension_numbers<[1], [0], [0], [1], [0, 0, 1, 1], [], []>} : vector<8x32xbf16>, vector<32x32xbf16>, vector<8x32xf32> -> vector<8x32xf32>
    %cst_14 = arith.constant 0.353553385 : f32
    %32 = vector.broadcast %cst_14 : f32 to vector<8x32xf32>
    %33 = arith.mulf %31, %32 : vector<8x32xf32>
    %34 = vector.extract_strided_slice %33 {offsets = [0, 0], sizes = [8, 8], strides = [1, 1]} : vector<8x32xf32> to vector<8x8xf32>
    %35 = vector.shape_cast %34 : vector<8x8xf32> to vector<1x8x8xf32>
    %36 = vector.extract_strided_slice %33 {offsets = [0, 8], sizes = [8, 8], strides = [1, 1]} : vector<8x32xf32> to vector<8x8xf32>
    %37 = vector.shape_cast %36 : vector<8x8xf32> to vector<1x8x8xf32>
    %38 = vector.extract_strided_slice %33 {offsets = [0, 16], sizes = [8, 8], strides = [1, 1]} : vector<8x32xf32> to vector<8x8xf32>
    %39 = vector.shape_cast %38 : vector<8x8xf32> to vector<1x8x8xf32>
    %40 = vector.extract_strided_slice %33 {offsets = [0, 24], sizes = [8, 8], strides = [1, 1]} : vector<8x32xf32> to vector<8x8xf32>
    %41 = vector.shape_cast %40 : vector<8x8xf32> to vector<1x8x8xf32>
    %42 = tpu.concatenate %35, %37, %39, %41 in 0 : vector<1x8x8xf32>, vector<1x8x8xf32>, vector<1x8x8xf32>, vector<1x8x8xf32> -> vector<4x8x8xf32>
    %43 = arith.truncf %42 : vector<4x8x8xf32> to vector<4x8x8xbf16>
    %c0_15 = arith.constant 0 : index
    %c0_16 = arith.constant 0 : index
    %c0_17 = arith.constant 0 : index
    %44 = vector.load %arg18[%c0_15, %c0_16, %c0_17] : memref<4x16x8xbf16, #tpu.memory_space<vmem>>, vector<4x16x8xbf16>
    "tpu.trace_start"() <{level = 10 : i32, message = "hqd,hkd->hqk"}> : () -> ()
    %cst_18 = arith.constant dense<0.000000e+00> : vector<4x8x16xf32>
    %45 = tpu.matmul %43, %44, %cst_18 {dimension_numbers = #tpu.dot_dimension_numbers<[2], [2], [1], [1], [0, 0, 0, 1, 1, 1], [0], [0]>} : vector<4x8x8xbf16>, vector<4x16x8xbf16>, vector<4x8x16xf32> -> vector<4x8x16xf32>
    "tpu.trace_stop"() : () -> ()
    %cst_19 = arith.constant dense<0xFF800000> : vector<4x8xf32>
    %46 = vector.multi_reduction <maximumf>, %45, %cst_19 [2] : vector<4x8x16xf32> to vector<4x8xf32>
    %47 = vector.shape_cast %46 : vector<4x8xf32> to vector<4x8x1xf32>
    %48 = vector.broadcast %47 : vector<4x8x1xf32> to vector<4x8x16xf32>
    %49 = arith.subf %45, %48 : vector<4x8x16xf32>
    %50 = math.exp %49 : vector<4x8x16xf32>
    %cst_20 = arith.constant dense<0.000000e+00> : vector<4x8xf32>
    %51 = vector.multi_reduction <add>, %50, %cst_20 [2] : vector<4x8x16xf32> to vector<4x8xf32>
    %52 = vector.shape_cast %51 : vector<4x8xf32> to vector<4x8x1xf32>
    %53 = tpu.reciprocal %52 {approx = true} : vector<4x8x1xf32> -> vector<4x8x1xf32>
    %54 = vector.broadcast %53 : vector<4x8x1xf32> to vector<4x8x16xf32>
    %55 = arith.mulf %50, %54 : vector<4x8x16xf32>
    %56 = arith.truncf %55 : vector<4x8x16xf32> to vector<4x8x16xbf16>
    %c0_21 = arith.constant 0 : index
    %c0_22 = arith.constant 0 : index
    %c0_23 = arith.constant 0 : index
    %57 = vector.load %arg19[%c0_21, %c0_22, %c0_23] : memref<4x16x8xbf16, #tpu.memory_space<vmem>>, vector<4x16x8xbf16>
    "tpu.trace_start"() <{level = 10 : i32, message = "hqk,hkd->hqd"}> : () -> ()
    %cst_24 = arith.constant dense<0.000000e+00> : vector<4x8x8xf32>
    %58 = tpu.matmul %56, %57, %cst_24 {dimension_numbers = #tpu.dot_dimension_numbers<[2], [1], [1], [2], [0, 0, 0, 1, 1, 2], [0], [0]>} : vector<4x8x16xbf16>, vector<4x16x8xbf16>, vector<4x8x8xf32> -> vector<4x8x8xf32>
    "tpu.trace_stop"() : () -> ()
    %59 = arith.truncf %58 : vector<4x8x8xf32> to vector<4x8x8xbf16>
    %c0_25 = arith.constant 0 : index
    %c0_26 = arith.constant 0 : index
    %c0_27 = arith.constant 0 : index
    %60 = vector.load %arg9[%c0_25, %c0_26, %c0_27] : memref<4x8x32xbf16, #tpu.memory_space<vmem>>, vector<4x8x32xbf16>
    "tpu.trace_start"() <{level = 10 : i32, message = "hqd,hdc->hqc"}> : () -> ()
    %cst_28 = arith.constant dense<0.000000e+00> : vector<4x8x32xf32>
    %61 = tpu.matmul %59, %60, %cst_28 {dimension_numbers = #tpu.dot_dimension_numbers<[2], [1], [1], [2], [0, 0, 0, 1, 1, 2], [0], [0]>} : vector<4x8x8xbf16>, vector<4x8x32xbf16>, vector<4x8x32xf32> -> vector<4x8x32xf32>
    "tpu.trace_stop"() : () -> ()
    %cst_29 = arith.constant dense<0.000000e+00> : vector<8x32xf32>
    %62 = vector.multi_reduction <add>, %61, %cst_29 [0] : vector<4x8x32xf32> to vector<8x32xf32>
    %c0_30 = arith.constant 0 : index
    %c0_31 = arith.constant 0 : index
    %63 = vector.load %arg10[%c0_30, %c0_31] : memref<1x32xf32, #tpu.memory_space<vmem>>, vector<1x32xf32>
    %64 = vector.broadcast %63 : vector<1x32xf32> to vector<8x32xf32>
    %65 = arith.addf %62, %64 : vector<8x32xf32>
    %66 = arith.addf %1, %65 : vector<8x32xf32>
    %c0_32 = arith.constant 0 : index
    %c0_33 = arith.constant 0 : index
    %67 = vector.load %arg11[%c0_32, %c0_33] : memref<1x32xf32, #tpu.memory_space<vmem>>, vector<1x32xf32>
    %c0_34 = arith.constant 0 : index
    %c0_35 = arith.constant 0 : index
    %68 = vector.load %arg12[%c0_34, %c0_35] : memref<1x32xf32, #tpu.memory_space<vmem>>, vector<1x32xf32>
    %cst_36 = arith.constant dense<0.000000e+00> : vector<8xf32>
    %69 = vector.multi_reduction <add>, %66, %cst_36 [1] : vector<8x32xf32> to vector<8xf32>
    %70 = vector.shape_cast %69 : vector<8xf32> to vector<8x1xf32>
    %cst_37 = arith.constant 3.200000e+01 : f32
    %71 = vector.broadcast %cst_37 : f32 to vector<8x1xf32>
    %72 = arith.divf %70, %71 : vector<8x1xf32>
    %73 = vector.broadcast %72 : vector<8x1xf32> to vector<8x32xf32>
    %74 = arith.subf %66, %73 : vector<8x32xf32>
    %75 = arith.mulf %74, %74 : vector<8x32xf32>
    %cst_38 = arith.constant dense<0.000000e+00> : vector<8xf32>
    %76 = vector.multi_reduction <add>, %75, %cst_38 [1] : vector<8x32xf32> to vector<8xf32>
    %77 = vector.shape_cast %76 : vector<8xf32> to vector<8x1xf32>
    %cst_39 = arith.constant 3.200000e+01 : f32
    %78 = vector.broadcast %cst_39 : f32 to vector<8x1xf32>
    %79 = arith.divf %77, %78 : vector<8x1xf32>
    %80 = vector.broadcast %72 : vector<8x1xf32> to vector<8x32xf32>
    %81 = arith.subf %66, %80 : vector<8x32xf32>
    %cst_40 = arith.constant 9.99999997E-7 : f32
    %82 = vector.broadcast %cst_40 : f32 to vector<8x1xf32>
    %83 = arith.addf %79, %82 : vector<8x1xf32>
    %84 = math.rsqrt %83 : vector<8x1xf32>
    %85 = vector.broadcast %84 : vector<8x1xf32> to vector<8x32xf32>
    %86 = arith.mulf %81, %85 : vector<8x32xf32>
    %87 = vector.broadcast %67 : vector<1x32xf32> to vector<8x32xf32>
    %88 = arith.mulf %86, %87 : vector<8x32xf32>
    %89 = vector.broadcast %68 : vector<1x32xf32> to vector<8x32xf32>
    %90 = arith.addf %88, %89 : vector<8x32xf32>
    %91 = arith.truncf %90 : vector<8x32xf32> to vector<8x32xbf16>
    %c0_41 = arith.constant 0 : index
    %c0_42 = arith.constant 0 : index
    %92 = vector.load %arg13[%c0_41, %c0_42] : memref<32x128xbf16, #tpu.memory_space<vmem>>, vector<32x128xbf16>
    %cst_43 = arith.constant dense<0.000000e+00> : vector<8x128xf32>
    %93 = tpu.matmul %91, %92, %cst_43 {dimension_numbers = #tpu.dot_dimension_numbers<[1], [0], [0], [1], [0, 0, 1, 1], [], []>} : vector<8x32xbf16>, vector<32x128xbf16>, vector<8x128xf32> -> vector<8x128xf32>
    %c0_44 = arith.constant 0 : index
    %c0_45 = arith.constant 0 : index
    %94 = vector.load %arg14[%c0_44, %c0_45] : memref<1x128xf32, #tpu.memory_space<vmem>>, vector<1x128xf32>
    %95 = vector.broadcast %94 : vector<1x128xf32> to vector<8x128xf32>
    %96 = arith.addf %93, %95 : vector<8x128xf32>
    %cst_46 = arith.constant 5.000000e-01 : f32
    %97 = vector.broadcast %cst_46 : f32 to vector<8x128xf32>
    %98 = arith.mulf %97, %96 : vector<8x128xf32>
    %cst_47 = arith.constant 0.707106769 : f32
    %99 = vector.broadcast %cst_47 : f32 to vector<8x128xf32>
    %100 = arith.mulf %96, %99 : vector<8x128xf32>
    %101 = math.erf %100 : vector<8x128xf32>
    %cst_48 = arith.constant 1.000000e+00 : f32
    %102 = vector.broadcast %cst_48 : f32 to vector<8x128xf32>
    %103 = arith.addf %102, %101 : vector<8x128xf32>
    %104 = arith.mulf %98, %103 : vector<8x128xf32>
    %105 = arith.truncf %104 : vector<8x128xf32> to vector<8x128xbf16>
    %c0_49 = arith.constant 0 : index
    %c0_50 = arith.constant 0 : index
    %106 = vector.load %arg15[%c0_49, %c0_50] : memref<128x32xbf16, #tpu.memory_space<vmem>>, vector<128x32xbf16>
    %cst_51 = arith.constant dense<0.000000e+00> : vector<8x32xf32>
    %107 = tpu.matmul %105, %106, %cst_51 {dimension_numbers = #tpu.dot_dimension_numbers<[1], [0], [0], [1], [0, 0, 1, 1], [], []>} : vector<8x128xbf16>, vector<128x32xbf16>, vector<8x32xf32> -> vector<8x32xf32>
    %c0_52 = arith.constant 0 : index
    %c0_53 = arith.constant 0 : index
    %108 = vector.load %arg16[%c0_52, %c0_53] : memref<1x32xf32, #tpu.memory_space<vmem>>, vector<1x32xf32>
    %109 = vector.broadcast %108 : vector<1x32xf32> to vector<8x32xf32>
    %110 = arith.addf %107, %109 : vector<8x32xf32>
    %111 = arith.addf %66, %110 : vector<8x32xf32>
    %c0_54 = arith.constant 0 : index
    %c0_55 = arith.constant 0 : index
    %c0_56 = arith.constant 0 : index
    %112 = vector.load %arg17[%c0_54, %c0_55, %c0_56] : memref<1x8x32xf32, #tpu.memory_space<vmem>>, vector<1x8x32xf32>
    %113 = vector.shape_cast %112 : vector<1x8x32xf32> to vector<8x32xf32>
    %114 = vector.shape_cast %111 : vector<8x32xf32> to vector<1x8x32xf32>
    tpu.vector_store %arg17[%c0_54, %c0_55, %c0_56], %114 {strides = array<i32>} : memref<1x8x32xf32, #tpu.memory_space<vmem>>, vector<1x8x32xf32>,
    return
  }
  func.func @transform_0(%arg0: i32, %arg1: i32) -> (i32, i32, i32) {
    %c0_i32 = arith.constant 0 : i32
    %c0_i32_0 = arith.constant 0 : i32
    %c0_i32_1 = arith.constant 0 : i32
    return %arg0, %c0_i32, %c0_i32_0 : i32, i32, i32
  }
  func.func @transform_1(%arg0: i32, %arg1: i32) -> (i32, i32, i32) {
    %c0_i32 = arith.constant 0 : i32
    %c0_i32_0 = arith.constant 0 : i32
    return %arg0, %arg1, %c0_i32 : i32, i32, i32
  }
  func.func @transform_2(%arg0: i32, %arg1: i32) -> (i32, i32) {
    %c0_i32 = arith.constant 0 : i32
    %c0_i32_0 = arith.constant 0 : i32
    %c0_i32_1 = arith.constant 0 : i32
    return %c0_i32, %c0_i32_0 : i32, i32
  }
  func.func @transform_3(%arg0: i32, %arg1: i32) -> (i32, i32) {
    %c0_i32 = arith.constant 0 : i32
    %c0_i32_0 = arith.constant 0 : i32
    %c0_i32_1 = arith.constant 0 : i32
    return %c0_i32, %c0_i32_0 : i32, i32
  }
  func.func @transform_4(%arg0: i32, %arg1: i32) -> (i32, i32) {
    %c0_i32 = arith.constant 0 : i32
    %c0_i32_0 = arith.constant 0 : i32
    %c0_i32_1 = arith.constant 0 : i32
    return %c0_i32, %c0_i32_0 : i32, i32
  }
  func.func @transform_5(%arg0: i32, %arg1: i32) -> (i32, i32) {
    %c0_i32 = arith.constant 0 : i32
    %c0_i32_0 = arith.constant 0 : i32
    %c0_i32_1 = arith.constant 0 : i32
    return %c0_i32, %c0_i32_0 : i32, i32
  }
  func.func @transform_6(%arg0: i32, %arg1: i32) -> (i32, i32) {
    %c0_i32 = arith.constant 0 : i32
    %c0_i32_0 = arith.constant 0 : i32
    %c0_i32_1 = arith.constant 0 : i32
    return %c0_i32, %c0_i32_0 : i32, i32
  }
  func.func @transform_7(%arg0: i32, %arg1: i32) -> (i32, i32, i32) {
    %c0_i32 = arith.constant 0 : i32
    %c0_i32_0 = arith.constant 0 : i32
    %c0_i32_1 = arith.constant 0 : i32
    %c0_i32_2 = arith.constant 0 : i32
    return %c0_i32, %c0_i32_0, %c0_i32_1 : i32, i32, i32
  }
  func.func @transform_8(%arg0: i32, %arg1: i32) -> (i32, i32) {
    %c0_i32 = arith.constant 0 : i32
    %c0_i32_0 = arith.constant 0 : i32
    %c0_i32_1 = arith.constant 0 : i32
    return %c0_i32, %c0_i32_0 : i32, i32
  }
  func.func @transform_9(%arg0: i32, %arg1: i32) -> (i32, i32) {
    %c0_i32 = arith.constant 0 : i32
    %c0_i32_0 = arith.constant 0 : i32
    %c0_i32_1 = arith.constant 0 : i32
    return %c0_i32, %c0_i32_0 : i32, i32
  }
  func.func @transform_10(%arg0: i32, %arg1: i32) -> (i32, i32) {
    %c0_i32 = arith.constant 0 : i32
    %c0_i32_0 = arith.constant 0 : i32
    %c0_i32_1 = arith.constant 0 : i32
    return %c0_i32, %c0_i32_0 : i32, i32
  }
  func.func @transform_11(%arg0: i32, %arg1: i32) -> (i32, i32) {
    %c0_i32 = arith.constant 0 : i32
    %c0_i32_0 = arith.constant 0 : i32
    %c0_i32_1 = arith.constant 0 : i32
    return %c0_i32, %c0_i32_0 : i32, i32
  }
  func.func @transform_12(%arg0: i32, %arg1: i32) -> (i32, i32) {
    %c0_i32 = arith.constant 0 : i32
    %c0_i32_0 = arith.constant 0 : i32
    %c0_i32_1 = arith.constant 0 : i32
    return %c0_i32, %c0_i32_0 : i32, i32
  }
  func.func @transform_13(%arg0: i32, %arg1: i32) -> (i32, i32) {
    %c0_i32 = arith.constant 0 : i32
    %c0_i32_0 = arith.constant 0 : i32
    %c0_i32_1 = arith.constant 0 : i32
    return %c0_i32, %c0_i32_0 : i32, i32
  }
  func.func @transform_14(%arg0: i32, %arg1: i32) -> (i32, i32) {
    %c0_i32 = arith.constant 0 : i32
    %c0_i32_0 = arith.constant 0 : i32
    %c0_i32_1 = arith.constant 0 : i32
    return %c0_i32, %c0_i32_0 : i32, i32
  }
  func.func @transform_15(%arg0: i32, %arg1: i32) -> (i32, i32, i32) {
    %c0_i32 = arith.constant 0 : i32
    %c0_i32_0 = arith.constant 0 : i32
    return %arg0, %arg1, %c0_i32 : i32, i32, i32
  }
}

</mosaic_0001>

<llo_original>
// kernel: tpu_custom_call.1
$region0: #{tpu_custom_call.1}
  #allocation0 [shape = 'u32[]', space=smem, size = 0x4, offset = 0x4, fixed_abs, tag = 'smem constant byte address 0x4 - core index']
  #allocation1 [shape = 'u32[144,128]{1,0:T(1,128)}', space=vmem, size = 0x12000, scoped, tag = 'internal scratch']
  #allocation2 [shape = 'bf16[4,16,8]{2,1,0:T(8,128)(2,1)}', space=vmem, size = 0x4000, scoped, tag = 'scratch operand']
  #allocation3 [shape = 'bf16[4,16,8]{2,1,0:T(8,128)(2,1)}', space=vmem, size = 0x4000, scoped, tag = 'scratch operand']
  %s0 = inlined_call_operand.vmem [shape: f32[2,16,32], index: 0, kind: input, shape index: {}]
  %s1 = inlined_call_operand.vmem [shape: f32[2,16,32], index: 1, kind: input, shape index: {}]
  %s2 = inlined_call_operand.hbm [shape: f32[1,32], index: 2, kind: input, shape index: {}]
  %s3 = inlined_call_operand.hbm [shape: f32[1,32], index: 3, kind: input, shape index: {}]
  %s4 = inlined_call_operand.vmem [shape: bf16[32,32], index: 4, kind: input, shape index: {}]
  %s5 = inlined_call_operand.hbm [shape: bf16[32,32], index: 5, kind: input, shape index: {}]
  %s6 = inlined_call_operand.hbm [shape: bf16[32,32], index: 6, kind: input, shape index: {}]
  %s7 = inlined_call_operand.hbm [shape: bf16[4,8,32], index: 7, kind: input, shape index: {}]
  %s8 = inlined_call_operand.hbm [shape: f32[1,32], index: 8, kind: input, shape index: {}]
  %s9 = inlined_call_operand.hbm [shape: f32[1,32], index: 9, kind: input, shape index: {}]
  %s10 = inlined_call_operand.vmem [shape: f32[1,32], index: 10, kind: input, shape index: {}]
  %s11 = inlined_call_operand.vmem [shape: bf16[32,128], index: 11, kind: input, shape index: {}]
  %s12 = inlined_call_operand.vmem [shape: f32[1,128], index: 12, kind: input, shape index: {}]
  %s13 = inlined_call_operand.vmem [shape: bf16[128,32], index: 13, kind: input, shape index: {}]
  %s14 = inlined_call_operand.vmem [shape: f32[1,32], index: 14, kind: input, shape index: {}]
  %s15 = inlined_call_operand.hbm [shape: f32[2,16,32], index: 15, kind: output, shape index: {}]
  %s16 = sld [smem:[#allocation0]]
  $region125: #{tpu_custom_call.1} parent=0
    _
  %s18 = ssub.s32 1, %s16
  %s19 = scalar_select 0, %s18, %s16
  $region1: #{tpu_custom_call.1} parent=0
    #allocation4 [shape = 'u8[512]{0}', space=vmem, size = 0x400, scoped, tag = 'input window, operand 2, single buffered']
    #allocation5 [shape = 's32[2]{0}', space=sflag, size = 0x8, scoped, tag = 'scoped memory for tpu_custom_call.1']
    #allocation6 [shape = 's32[2]{0}', space=sflag, size = 0x8, scoped, tag = 'scoped memory for tpu_custom_call.1']
    #allocation7 [shape = 'u8[512]{0}', space=vmem, size = 0x400, scoped, tag = 'input window, operand 3, single buffered']
    #allocation8 [shape = 's32[1]{0}', space=sflag, size = 0x4, scoped, tag = 'scoped memory for tpu_custom_call.1']
    #allocation9 [shape = 'u8[8192]{0}', space=vmem, size = 0x2000, scoped, tag = 'input window, operand 5, single buffered']
    #allocation10 [shape = 'u8[8192]{0}', space=vmem, size = 0x2000, scoped, tag = 'input window, operand 6, single buffered']
    #allocation11 [shape = 's32[1]{0}', space=sflag, size = 0x4, scoped, tag = 'scoped memory for tpu_custom_call.1']
    #allocation12 [shape = 'u8[8192]{0}', space=vmem, size = 0x2000, scoped, tag = 'input window, operand 7, single buffered']
    #allocation13 [shape = 'u8[512]{0}', space=vmem, size = 0x400, scoped, tag = 'input window, operand 8, single buffered']
    #allocation14 [shape = 's32[1]{0}', space=sflag, size = 0x4, scoped, tag = 'scoped memory for tpu_custom_call.1']
    #allocation15 [shape = 'u8[512]{0}', space=vmem, size = 0x400, scoped, tag = 'input window, operand 9, single buffered']
    #allocation16 [shape = 'u8[8192]{0}', space=vmem, size = 0x2000, scoped, tag = 'output window, operand 0']
    %20 = vsyncpa [#allocation5], 0
    %21 = vsyncpa [#allocation8], 0
    %22 = vsyncpa [#allocation11], 0
    %23 = vsyncpa [#allocation14], 0
    %24 = vsyncpa [#allocation6], 0
    %s25 = scalar_lea.sflag [#allocation6], 1
    %26 = vsyncpa %s25, 0
    loop: start=0, step=1, limit=6
    $region2: #{tpu_custom_call.1} parent=1 // loop_pre_header
      _
    $region3: #{tpu_custom_call.1} parent=1 // loop_header
      %s28 = sphi 0, %s32
      %p29 = scmp.ge.s32.totalorder %s28, 6
      %s35 = sphi 0, %s47
      %s36 = sphi 0, %s43
      %s37 = sphi 0, %s35
      %s38 = sphi 0, %s36
      %s39 = sphi 0, %s37
      %s40 = sphi 0, %s38
      %s50 = sphi 0, %s52
      %s53 = sphi 0, %s50
      %s54 = sphi 0, %s53
      %s70 = sphi 0, %s54
      %s78 = sphi 0, %s80
      %s81 = sphi 0, %s78
      %s82 = sphi 0, %s81
      %s98 = sphi 0, %s82
      %s102 = sphi 0, %s102
      %s104 = sphi 0, %s102
      %s105 = sphi 0, %s104
      %s119 = sphi 0, %s105
      %s123 = sphi 0, %s123
      %s125 = sphi 0, %s123
      %s126 = sphi 0, %s125
      %s140 = sphi 0, %s126
      %s144 = sphi 0, %s144
      %s146 = sphi 0, %s144
      %s147 = sphi 0, %s146
      %s161 = sphi 0, %s147
      %s165 = sphi 0, %s165
      %s167 = sphi 0, %s165
      %s168 = sphi 0, %s167
      %s182 = sphi 0, %s168
      %s186 = sphi 0, %s186
      %s188 = sphi 0, %s186
      %s189 = sphi 0, %s188
      %s203 = sphi 0, %s189
      %s207 = sphi 0, %s207
      %s209 = sphi 0, %s207
      %s210 = sphi 0, %s209
      %s224 = sphi 0, %s210
      %s228 = sphi 0, %s228
      %s230 = sphi 0, %s228
      %s231 = sphi 0, %s230
      %s245 = sphi 0, %s231
      %s249 = sphi 0, %s249
      %s251 = sphi 0, %s249
      %s252 = sphi 0, %s251
      %s266 = sphi 0, %s252
      %s270 = sphi 0, %s270
      %s272 = sphi 0, %s270
      %s273 = sphi 0, %s272
      %s287 = sphi 0, %s273
      %s291 = sphi 0, %s291
      %s293 = sphi 0, %s291
      %s294 = sphi 0, %s293
      %s308 = sphi 0, %s294
      %s312 = sphi 0, %s312
      %s314 = sphi 0, %s312
      %s315 = sphi 0, %s314
      %s329 = sphi 0, %s315
      %s333 = sphi 0, %s333
      %s335 = sphi 0, %s333
      %s336 = sphi 0, %s335
      %s350 = sphi 0, %s336
      %s354 = sphi 0, %s354
      %s356 = sphi 0, %s354
      %s357 = sphi 0, %s356
      %s371 = sphi 0, %s357
      %s379 = sphi 0, %s381
      %s382 = sphi 0, %s379
      %s383 = sphi 0, %s382
      %s399 = sphi 0, %s383
    $region4: #{tpu_custom_call.1} parent=1 // loop_header_branch
      %31 = sbr.rel (%p29) target = $region8
    $region5: #{tpu_custom_call.1} parent=1 // loop_body
      %s33 = ssub.s32 %s28, 1
      %s34 = ssub.s32 %s28, 2
      %s41 = sadd.s32 1, %s36
      %p42 = scmp.ge.s32.totalorder %s41, 2
      %s43 = scalar_select %p42, 0, %s41
      %s44 = sadd.s32 1, %s35
      %s45 = scalar_select %p42, %s44, %s35
      %p46 = scmp.ge.s32.totalorder %s45, 2
      %s47 = scalar_select %p46, 0, %s45
      %s48 = ssub.s32 %s35, %s47
      %p49 = scmp.eq.s32.totalorder %s48, 0
      %s51 = sadd.s32 %s50, 1
      %s52 = scalar_select %p49, %s50, %s51
      %p55 = pneg %p49
      %p56 = scmp.eq.s32.totalorder %s28, 3
      %p57 = por %p55, %p56
      %p58 = scmp.ne.s32.totalorder %s50, %s53
      %p59 = scmp.eq.s32.totalorder %s28, 0
      %p60 = por %p58, %p59
      %p61 = scmp.ne.s32.totalorder %s50, %s53
      %p62 = scmp.eq.s32.totalorder %s33, 3
      %p63 = por %p61, %p62
      %p64 = scmp.ne.s32.totalorder %s53, %s54
      %p65 = scmp.eq.s32.totalorder %s33, 0
      %p66 = por %p64, %p65
      %p67 = scmp.ne.s32.totalorder %s53, %s54
      %p68 = scmp.eq.s32.totalorder %s34, 3
      %p69 = por %p67, %p68
      %p71 = scmp.ne.s32.totalorder %s54, %s70
      %p72 = scmp.eq.s32.totalorder %s34, 0
      %p73 = por %p71, %p72
      %s74 = ssub.s32 %s35, %s47
      %s75 = ssub.s32 %s36, %s43
      %s76 = sor.u32 %s74, %s75
      %p77 = scmp.eq.s32.totalorder %s76, 0
      %s79 = sadd.s32 %s78, 1
      %s80 = scalar_select %p77, %s78, %s79
      %p83 = pneg %p77
      %p84 = scmp.eq.s32.totalorder %s28, 3
      %p85 = por %p83, %p84
      %p86 = scmp.ne.s32.totalorder %s78, %s81
      %p87 = scmp.eq.s32.totalorder %s28, 0
      %p88 = por %p86, %p87
      %p89 = scmp.ne.s32.totalorder %s78, %s81
      %p90 = scmp.eq.s32.totalorder %s33, 3
      %p91 = por %p89, %p90
      %p92 = scmp.ne.s32.totalorder %s81, %s82
      %p93 = scmp.eq.s32.totalorder %s33, 0
      %p94 = por %p92, %p93
      %p95 = scmp.ne.s32.totalorder %s81, %s82
      %p96 = scmp.eq.s32.totalorder %s34, 3
      %p97 = por %p95, %p96
      %p99 = scmp.ne.s32.totalorder %s82, %s98
      %p100 = scmp.eq.s32.totalorder %s34, 0
      %p101 = por %p99, %p100
      %s103 = sadd.s32 %s102, 1
      %p106 = scmp.eq.s32.totalorder %s28, 3
      %p107 = scmp.ne.s32.totalorder %s102, %s104
      %p108 = scmp.eq.s32.totalorder %s28, 0
      %p109 = por %p107, %p108
      %p110 = scmp.ne.s32.totalorder %s102, %s104
      %p111 = scmp.eq.s32.totalorder %s33, 3
      %p112 = por %p110, %p111
      %p113 = scmp.ne.s32.totalorder %s104, %s105
      %p114 = scmp.eq.s32.totalorder %s33, 0
      %p115 = por %p113, %p114
      %p116 = scmp.ne.s32.totalorder %s104, %s105
      %p117 = scmp.eq.s32.totalorder %s34, 3
      %p118 = por %p116, %p117
      %p120 = scmp.ne.s32.totalorder %s105, %s119
      %p121 = scmp.eq.s32.totalorder %s34, 0
      %p122 = por %p120, %p121
      %s124 = sadd.s32 %s123, 1
      %p127 = scmp.eq.s32.totalorder %s28, 3
      %p128 = scmp.ne.s32.totalorder %s123, %s125
      %p129 = scmp.eq.s32.totalorder %s28, 0
      %p130 = por %p128, %p129
      %p131 = scmp.ne.s32.totalorder %s123, %s125
      %p132 = scmp.eq.s32.totalorder %s33, 3
      %p133 = por %p131, %p132
      %p134 = scmp.ne.s32.totalorder %s125, %s126
      %p135 = scmp.eq.s32.totalorder %s33, 0
      %p136 = por %p134, %p135
      %p137 = scmp.ne.s32.totalorder %s125, %s126
      %p138 = scmp.eq.s32.totalorder %s34, 3
      %p139 = por %p137, %p138
      %p141 = scmp.ne.s32.totalorder %s126, %s140
      %p142 = scmp.eq.s32.totalorder %s34, 0
      %p143 = por %p141, %p142
      %s145 = sadd.s32 %s144, 1
      %p148 = scmp.eq.s32.totalorder %s28, 3
      %p149 = scmp.ne.s32.totalorder %s144, %s146
      %p150 = scmp.eq.s32.totalorder %s28, 0
      %p151 = por %p149, %p150
      %p152 = scmp.ne.s32.totalorder %s144, %s146
      %p153 = scmp.eq.s32.totalorder %s33, 3
      %p154 = por %p152, %p153
      %p155 = scmp.ne.s32.totalorder %s146, %s147
      %p156 = scmp.eq.s32.totalorder %s33, 0
      %p157 = por %p155, %p156
      %p158 = scmp.ne.s32.totalorder %s146, %s147
      %p159 = scmp.eq.s32.totalorder %s34, 3
      %p160 = por %p158, %p159
      %p162 = scmp.ne.s32.totalorder %s147, %s161
      %p163 = scmp.eq.s32.totalorder %s34, 0
      %p164 = por %p162, %p163
      %s166 = sadd.s32 %s165, 1
      %p169 = scmp.eq.s32.totalorder %s28, 3
      %p170 = scmp.ne.s32.totalorder %s165, %s167
      %p171 = scmp.eq.s32.totalorder %s28, 0
      %p172 = por %p170, %p171
      %p173 = scmp.ne.s32.totalorder %s165, %s167
      %p174 = scmp.eq.s32.totalorder %s33, 3
      %p175 = por %p173, %p174
      %p176 = scmp.ne.s32.totalorder %s167, %s168
      %p177 = scmp.eq.s32.totalorder %s33, 0
      %p178 = por %p176, %p177
      %p179 = scmp.ne.s32.totalorder %s167, %s168
      %p180 = scmp.eq.s32.totalorder %s34, 3
      %p181 = por %p179, %p180
      %p183 = scmp.ne.s32.totalorder %s168, %s182
      %p184 = scmp.eq.s32.totalorder %s34, 0
      %p185 = por %p183, %p184
      %s187 = sadd.s32 %s186, 1
      %p190 = scmp.eq.s32.totalorder %s28, 3
      %p191 = scmp.ne.s32.totalorder %s186, %s188
      %p192 = scmp.eq.s32.totalorder %s28, 0
      %p193 = por %p191, %p192
      %p194 = scmp.ne.s32.totalorder %s186, %s188
      %p195 = scmp.eq.s32.totalorder %s33, 3
      %p196 = por %p194, %p195
      %p197 = scmp.ne.s32.totalorder %s188, %s189
      %p198 = scmp.eq.s32.totalorder %s33, 0
      %p199 = por %p197, %p198
      %p200 = scmp.ne.s32.totalorder %s188, %s189
      %p201 = scmp.eq.s32.totalorder %s34, 3
      %p202 = por %p200, %p201
      %p204 = scmp.ne.s32.totalorder %s189, %s203
      %p205 = scmp.eq.s32.totalorder %s34, 0
      %p206 = por %p204, %p205
      %s208 = sadd.s32 %s207, 1
      %p211 = scmp.eq.s32.totalorder %s28, 3
      %p212 = scmp.ne.s32.totalorder %s207, %s209
      %p213 = scmp.eq.s32.totalorder %s28, 0
      %p214 = por %p212, %p213
      %p215 = scmp.ne.s32.totalorder %s207, %s209
      %p216 = scmp.eq.s32.totalorder %s33, 3
      %p217 = por %p215, %p216
      %p218 = scmp.ne.s32.totalorder %s209, %s210
      %p219 = scmp.eq.s32.totalorder %s33, 0
      %p220 = por %p218, %p219
      %p221 = scmp.ne.s32.totalorder %s209, %s210
      %p222 = scmp.eq.s32.totalorder %s34, 3
      %p223 = por %p221, %p222
      %p225 = scmp.ne.s32.totalorder %s210, %s224
      %p226 = scmp.eq.s32.totalorder %s34, 0
      %p227 = por %p225, %p226
      %s229 = sadd.s32 %s228, 1
      %p232 = scmp.eq.s32.totalorder %s28, 3
      %p233 = scmp.ne.s32.totalorder %s228, %s230
      %p234 = scmp.eq.s32.totalorder %s28, 0
      %p235 = por %p233, %p234
      %p236 = scmp.ne.s32.totalorder %s228, %s230
      %p237 = scmp.eq.s32.totalorder %s33, 3
      %p238 = por %p236, %p237
      %p239 = scmp.ne.s32.totalorder %s230, %s231
      %p240 = scmp.eq.s32.totalorder %s33, 0
      %p241 = por %p239, %p240
      %p242 = scmp.ne.s32.totalorder %s230, %s231
      %p243 = scmp.eq.s32.totalorder %s34, 3
      %p244 = por %p242, %p243
      %p246 = scmp.ne.s32.totalorder %s231, %s245
      %p247 = scmp.eq.s32.totalorder %s34, 0
      %p248 = por %p246, %p247
      %s250 = sadd.s32 %s249, 1
      %p253 = scmp.eq.s32.totalorder %s28, 3
      %p254 = scmp.ne.s32.totalorder %s249, %s251
      %p255 = scmp.eq.s32.totalorder %s28, 0
      %p256 = por %p254, %p255
      %p257 = scmp.ne.s32.totalorder %s249, %s251
      %p258 = scmp.eq.s32.totalorder %s33, 3
      %p259 = por %p257, %p258
      %p260 = scmp.ne.s32.totalorder %s251, %s252
      %p261 = scmp.eq.s32.totalorder %s33, 0
      %p262 = por %p260, %p261
      %p263 = scmp.ne.s32.totalorder %s251, %s252
      %p264 = scmp.eq.s32.totalorder %s34, 3
      %p265 = por %p263, %p264
      %p267 = scmp.ne.s32.totalorder %s252, %s266
      %p268 = scmp.eq.s32.totalorder %s34, 0
      %p269 = por %p267, %p268
      %s271 = sadd.s32 %s270, 1
      %p274 = scmp.eq.s32.totalorder %s28, 3
      %p275 = scmp.ne.s32.totalorder %s270, %s272
      %p276 = scmp.eq.s32.totalorder %s28, 0
      %p277 = por %p275, %p276
      %p278 = scmp.ne.s32.totalorder %s270, %s272
      %p279 = scmp.eq.s32.totalorder %s33, 3
      %p280 = por %p278, %p279
      %p281 = scmp.ne.s32.totalorder %s272, %s273
      %p282 = scmp.eq.s32.totalorder %s33, 0
      %p283 = por %p281, %p282
      %p284 = scmp.ne.s32.totalorder %s272, %s273
      %p285 = scmp.eq.s32.totalorder %s34, 3
      %p286 = por %p284, %p285
      %p288 = scmp.ne.s32.totalorder %s273, %s287
      %p289 = scmp.eq.s32.totalorder %s34, 0
      %p290 = por %p288, %p289
      %s292 = sadd.s32 %s291, 1
      %p295 = scmp.eq.s32.totalorder %s28, 3
      %p296 = scmp.ne.s32.totalorder %s291, %s293
      %p297 = scmp.eq.s32.totalorder %s28, 0
      %p298 = por %p296, %p297
      %p299 = scmp.ne.s32.totalorder %s291, %s293
      %p300 = scmp.eq.s32.totalorder %s33, 3
      %p301 = por %p299, %p300
      %p302 = scmp.ne.s32.totalorder %s293, %s294
      %p303 = scmp.eq.s32.totalorder %s33, 0
      %p304 = por %p302, %p303
      %p305 = scmp.ne.s32.totalorder %s293, %s294
      %p306 = scmp.eq.s32.totalorder %s34, 3
      %p307 = por %p305, %p306
      %p309 = scmp.ne.s32.totalorder %s294, %s308
      %p310 = scmp.eq.s32.totalorder %s34, 0
      %p311 = por %p309, %p310
      %s313 = sadd.s32 %s312, 1
      %p316 = scmp.eq.s32.totalorder %s28, 3
      %p317 = scmp.ne.s32.totalorder %s312, %s314
      %p318 = scmp.eq.s32.totalorder %s28, 0
      %p319 = por %p317, %p318
      %p320 = scmp.ne.s32.totalorder %s312, %s314
      %p321 = scmp.eq.s32.totalorder %s33, 3
      %p322 = por %p320, %p321
      %p323 = scmp.ne.s32.totalorder %s314, %s315
      %p324 = scmp.eq.s32.totalorder %s33, 0
      %p325 = por %p323, %p324
      %p326 = scmp.ne.s32.totalorder %s314, %s315
      %p327 = scmp.eq.s32.totalorder %s34, 3
      %p328 = por %p326, %p327
      %p330 = scmp.ne.s32.totalorder %s315, %s329
      %p331 = scmp.eq.s32.totalorder %s34, 0
      %p332 = por %p330, %p331
      %s334 = sadd.s32 %s333, 1
      %p337 = scmp.eq.s32.totalorder %s28, 3
      %p338 = scmp.ne.s32.totalorder %s333, %s335
      %p339 = scmp.eq.s32.totalorder %s28, 0
      %p340 = por %p338, %p339
      %p341 = scmp.ne.s32.totalorder %s333, %s335
      %p342 = scmp.eq.s32.totalorder %s33, 3
      %p343 = por %p341, %p342
      %p344 = scmp.ne.s32.totalorder %s335, %s336
      %p345 = scmp.eq.s32.totalorder %s33, 0
      %p346 = por %p344, %p345
      %p347 = scmp.ne.s32.totalorder %s335, %s336
      %p348 = scmp.eq.s32.totalorder %s34, 3
      %p349 = por %p347, %p348
      %p351 = scmp.ne.s32.totalorder %s336, %s350
      %p352 = scmp.eq.s32.totalorder %s34, 0
      %p353 = por %p351, %p352
      %s355 = sadd.s32 %s354, 1
      %p358 = scmp.eq.s32.totalorder %s28, 3
      %p359 = scmp.ne.s32.totalorder %s354, %s356
      %p360 = scmp.eq.s32.totalorder %s28, 0
      %p361 = por %p359, %p360
      %p362 = scmp.ne.s32.totalorder %s354, %s356
      %p363 = scmp.eq.s32.totalorder %s33, 3
      %p364 = por %p362, %p363
      %p365 = scmp.ne.s32.totalorder %s356, %s357
      %p366 = scmp.eq.s32.totalorder %s33, 0
      %p367 = por %p365, %p366
      %p368 = scmp.ne.s32.totalorder %s356, %s357
      %p369 = scmp.eq.s32.totalorder %s34, 3
      %p370 = por %p368, %p369
      %p372 = scmp.ne.s32.totalorder %s357, %s371
      %p373 = scmp.eq.s32.totalorder %s34, 0
      %p374 = por %p372, %p373
      %s375 = ssub.s32 %s35, %s47
      %s376 = ssub.s32 %s36, %s43
      %s377 = sor.u32 %s375, %s376
      %p378 = scmp.eq.s32.totalorder %s377, 0
      %s380 = sadd.s32 %s379, 1
      %s381 = scalar_select %p378, %s379, %s380
      %p384 = pneg %p378
      %p385 = scmp.eq.s32.totalorder %s28, 3
      %p386 = por %p384, %p385
      %p387 = scmp.ne.s32.totalorder %s379, %s382
      %p388 = scmp.eq.s32.totalorder %s28, 0
      %p389 = por %p387, %p388
      %p390 = scmp.ne.s32.totalorder %s379, %s382
      %p391 = scmp.eq.s32.totalorder %s33, 3
      %p392 = por %p390, %p391
      %p393 = scmp.ne.s32.totalorder %s382, %s383
      %p394 = scmp.eq.s32.totalorder %s33, 0
      %p395 = por %p393, %p394
      %p396 = scmp.ne.s32.totalorder %s382, %s383
      %p397 = scmp.eq.s32.totalorder %s34, 3
      %p398 = por %p396, %p397
      %p400 = scmp.ne.s32.totalorder %s383, %s399
      %p401 = scmp.eq.s32.totalorder %s34, 0
      %p402 = por %p400, %p401
      %p403 = scmp.le.s32.totalorder 1, %s28
      %p404 = scmp.lt.s32.totalorder %s28, 5
      %p405 = pnand %p403, %p404
      %p406 = pneg %p405
      // Predicated region
      $region9: #{tpu_custom_call.1} parent=5 // pred_check
        _
      $region10: #{tpu_custom_call.1} parent=5 // pred_check_branch
        %408 = sbr.rel (%p405) target = $region12
      $region11: #{tpu_custom_call.1} parent=5 // pred_region
        %s409 = ssub.s32 %s28, 1
        // Predicated region
        $region13: #{tpu_custom_call.1} parent=11 // pred_check
          %p410 = pneg %p115
        $region14: #{tpu_custom_call.1} parent=11 // pred_check_branch
          %412 = sbr.rel (%p410) target = $region16
        $region15: #{tpu_custom_call.1} parent=11 // pred_region
          %s414 = ssub.s32 16, 16
          %415 = vsyncadd [#allocation5], %s414
          %s417 = sshll.u32 [#allocation4], 4
          %s418 = int_to_ptr.vmem [resolvable:$true] %s417
          %420 = dma.hbm_to_vmem [thread:$0]  %s2, 16, %s418, [#allocation5]
        $region16: #{tpu_custom_call.1} parent=11 // pred_fallthru
          _
        // Predicated region
        $region17: #{tpu_custom_call.1} parent=11 // pred_check
          %p421 = pneg %p136
        $region18: #{tpu_custom_call.1} parent=11 // pred_check_branch
          %423 = sbr.rel (%p421) target = $region20
        $region19: #{tpu_custom_call.1} parent=11 // pred_region
          %s425 = ssub.s32 16, 16
          %426 = vsyncadd [#allocation8], %s425
          %s428 = sshll.u32 [#allocation7], 4
          %s429 = int_to_ptr.vmem [resolvable:$true] %s428
          %431 = dma.hbm_to_vmem [thread:$0]  %s3, 16, %s429, [#allocation8]
        $region20: #{tpu_custom_call.1} parent=11 // pred_fallthru
          _
        // Predicated region
        $region21: #{tpu_custom_call.1} parent=11 // pred_check
          %p432 = pneg %p157
        $region22: #{tpu_custom_call.1} parent=11 // pred_check_branch
          %434 = sbr.rel (%p432) target = $region24
        $region23: #{tpu_custom_call.1} parent=11 // pred_region
          _
        $region24: #{tpu_custom_call.1} parent=11 // pred_fallthru
          _
        // Predicated region
        $region25: #{tpu_custom_call.1} parent=11 // pred_check
          %p435 = pneg %p178
        $region26: #{tpu_custom_call.1} parent=11 // pred_check_branch
          %437 = sbr.rel (%p435) target = $region28
        $region27: #{tpu_custom_call.1} parent=11 // pred_region
          %s439 = ssub.s32 256, 256
          %440 = vsyncadd [#allocation8], %s439
          %s441 = sshll.u32 [#allocation9], 4
          %s442 = int_to_ptr.vmem [resolvable:$true] %s441
          %447 = dma.hbm_to_vmem [thread:$0]  %s5, 256, %s442, [#allocation8], 64, 64, 4
        $region28: #{tpu_custom_call.1} parent=11 // pred_fallthru
          _
        // Predicated region
        $region29: #{tpu_custom_call.1} parent=11 // pred_check
          %p448 = pneg %p199
        $region30: #{tpu_custom_call.1} parent=11 // pred_check_branch
          %450 = sbr.rel (%p448) target = $region32
        $region31: #{tpu_custom_call.1} parent=11 // pred_region
          %s452 = ssub.s32 256, 256
          %453 = vsyncadd [#allocation11], %s452
          %s454 = sshll.u32 [#allocation10], 4
          %s455 = int_to_ptr.vmem [resolvable:$true] %s454
          %460 = dma.hbm_to_vmem [thread:$0]  %s6, 256, %s455, [#allocation11], 64, 64, 4
        $region32: #{tpu_custom_call.1} parent=11 // pred_fallthru
          _
        // Predicated region
        $region33: #{tpu_custom_call.1} parent=11 // pred_check
          %p461 = pneg %p220
        $region34: #{tpu_custom_call.1} parent=11 // pred_check_branch
          %463 = sbr.rel (%p461) target = $region36
        $region35: #{tpu_custom_call.1} parent=11 // pred_region
          %s465 = ssub.s32 256, 256
          %466 = vsyncadd [#allocation11], %s465
          %s467 = sshll.u32 [#allocation12], 4
          %s468 = int_to_ptr.vmem [resolvable:$true] %s467
          %473 = dma.hbm_to_vmem [thread:$0]  %s7, 256, %s468, [#allocation11], 64, 64, 4
        $region36: #{tpu_custom_call.1} parent=11 // pred_fallthru
          _
        // Predicated region
        $region37: #{tpu_custom_call.1} parent=11 // pred_check
          %p474 = pneg %p241
        $region38: #{tpu_custom_call.1} parent=11 // pred_check_branch
          %476 = sbr.rel (%p474) target = $region40
        $region39: #{tpu_custom_call.1} parent=11 // pred_region
          %s478 = ssub.s32 16, 16
          %479 = vsyncadd [#allocation14], %s478
          %s481 = sshll.u32 [#allocation13], 4
          %s482 = int_to_ptr.vmem [resolvable:$true] %s481
          %484 = dma.hbm_to_vmem [thread:$0]  %s8, 16, %s482, [#allocation14]
        $region40: #{tpu_custom_call.1} parent=11 // pred_fallthru
          _
        // Predicated region
        $region41: #{tpu_custom_call.1} parent=11 // pred_check
          %p485 = pneg %p262
        $region42: #{tpu_custom_call.1} parent=11 // pred_check_branch
          %487 = sbr.rel (%p485) target = $region44
        $region43: #{tpu_custom_call.1} parent=11 // pred_region
          %s489 = ssub.s32 16, 16
          %490 = vsyncadd [#allocation14], %s489
          %s492 = sshll.u32 [#allocation15], 4
          %s493 = int_to_ptr.vmem [resolvable:$true] %s492
          %495 = dma.hbm_to_vmem [thread:$0]  %s9, 16, %s493, [#allocation14]
        $region44: #{tpu_custom_call.1} parent=11 // pred_fallthru
          _
        // Predicated region
        $region45: #{tpu_custom_call.1} parent=11 // pred_check
          %p496 = pneg %p283
        $region46: #{tpu_custom_call.1} parent=11 // pred_check_branch
          %498 = sbr.rel (%p496) target = $region48
        $region47: #{tpu_custom_call.1} parent=11 // pred_region
          _
        $region48: #{tpu_custom_call.1} parent=11 // pred_fallthru
          _
        // Predicated region
        $region49: #{tpu_custom_call.1} parent=11 // pred_check
          %p499 = pneg %p304
        $region50: #{tpu_custom_call.1} parent=11 // pred_check_branch
          %501 = sbr.rel (%p499) target = $region52
        $region51: #{tpu_custom_call.1} parent=11 // pred_region
          _
        $region52: #{tpu_custom_call.1} parent=11 // pred_fallthru
          _
        // Predicated region
        $region53: #{tpu_custom_call.1} parent=11 // pred_check
          %p502 = pneg %p325
        $region54: #{tpu_custom_call.1} parent=11 // pred_check_branch
          %504 = sbr.rel (%p502) target = $region56
        $region55: #{tpu_custom_call.1} parent=11 // pred_region
          _
        $region56: #{tpu_custom_call.1} parent=11 // pred_fallthru
          _
        // Predicated region
        $region57: #{tpu_custom_call.1} parent=11 // pred_check
          %p505 = pneg %p346
        $region58: #{tpu_custom_call.1} parent=11 // pred_check_branch
          %507 = sbr.rel (%p505) target = $region60
        $region59: #{tpu_custom_call.1} parent=11 // pred_region
          _
        $region60: #{tpu_custom_call.1} parent=11 // pred_fallthru
          _
        // Predicated region
        $region61: #{tpu_custom_call.1} parent=11 // pred_check
          %p508 = pneg %p367
        $region62: #{tpu_custom_call.1} parent=11 // pred_check_branch
          %510 = sbr.rel (%p508) target = $region64
        $region63: #{tpu_custom_call.1} parent=11 // pred_region
          _
        $region64: #{tpu_custom_call.1} parent=11 // pred_fallthru
          _
      $region12: #{tpu_custom_call.1} parent=5 // pred_fallthru
        _
      %p511 = scmp.lt.s32.totalorder %s28, 4
      // Predicated region
      $region65: #{tpu_custom_call.1} parent=5 // pred_check
        %p512 = pneg %p511
      $region66: #{tpu_custom_call.1} parent=5 // pred_check_branch
        %514 = sbr.rel (%p512) target = $region68
      $region67: #{tpu_custom_call.1} parent=5 // pred_region
        // Predicated region
        $region69: #{tpu_custom_call.1} parent=67 // pred_check
          %p515 = pneg %p60
        $region70: #{tpu_custom_call.1} parent=67 // pred_check_branch
          %517 = sbr.rel (%p515) target = $region72
        $region71: #{tpu_custom_call.1} parent=67 // pred_region
          %p518 = scmp.lt.s32.totalorder %s35, 1
          %s519 = scalar_select %p518, %s35, 1
          %s520 = smul.addr %s519, 2
          %s521 = smul.addr %s520, 8
          %s522 = scalar_lea.vmem %s0, %s521
        $region72: #{tpu_custom_call.1} parent=67 // pred_fallthru
          _
        // Predicated region
        $region73: #{tpu_custom_call.1} parent=67 // pred_check
          %p523 = pneg %p88
        $region74: #{tpu_custom_call.1} parent=67 // pred_check_branch
          %525 = sbr.rel (%p523) target = $region76
        $region75: #{tpu_custom_call.1} parent=67 // pred_region
          %p526 = scmp.lt.s32.totalorder %s35, 1
          %s527 = scalar_select %p526, %s35, 1
          %p528 = scmp.lt.s32.totalorder %s36, 1
          %s529 = scalar_select %p528, %s36, 1
          %s530 = smul.addr %s527, 2
          %s531 = sadd.s32 %s529, %s530
          %s532 = smul.addr %s531, 8
          %s533 = scalar_lea.vmem %s1, %s532
        $region76: #{tpu_custom_call.1} parent=67 // pred_fallthru
          _
      $region68: #{tpu_custom_call.1} parent=5 // pred_fallthru
        _
      %p534 = scmp.le.s32.totalorder 1, %s28
      %p535 = scmp.lt.s32.totalorder %s28, 5
      %p536 = pnand %p534, %p535
      %p537 = pneg %p536
      // Predicated region
      $region77: #{tpu_custom_call.1} parent=5 // pred_check
        _
      $region78: #{tpu_custom_call.1} parent=5 // pred_check_branch
        %539 = sbr.rel (%p536) target = $region80
      $region79: #{tpu_custom_call.1} parent=5 // pred_region
        %s540 = ssub.s32 %s28, 1
        // Predicated region
        $region81: #{tpu_custom_call.1} parent=79 // pred_check
          %p541 = pneg %p115
        $region82: #{tpu_custom_call.1} parent=79 // pred_check_branch
          %543 = sbr.rel (%p541) target = $region84
        $region83: #{tpu_custom_call.1} parent=79 // pred_region
          %544 = dma.done [#allocation5], 16
        $region84: #{tpu_custom_call.1} parent=79 // pred_fallthru
          _
        // Predicated region
        $region85: #{tpu_custom_call.1} parent=79 // pred_check
          %p545 = pneg %p136
        $region86: #{tpu_custom_call.1} parent=79 // pred_check_branch
          %547 = sbr.rel (%p545) target = $region88
        $region87: #{tpu_custom_call.1} parent=79 // pred_region
          %548 = dma.done [#allocation8], 16
        $region88: #{tpu_custom_call.1} parent=79 // pred_fallthru
          _
        // Predicated region
        $region89: #{tpu_custom_call.1} parent=79 // pred_check
          %p549 = pneg %p178
        $region90: #{tpu_custom_call.1} parent=79 // pred_check_branch
          %551 = sbr.rel (%p549) target = $region92
        $region91: #{tpu_custom_call.1} parent=79 // pred_region
          %552 = dma.done [#allocation8], 256
        $region92: #{tpu_custom_call.1} parent=79 // pred_fallthru
          _
        // Predicated region
        $region93: #{tpu_custom_call.1} parent=79 // pred_check
          %p553 = pneg %p199
        $region94: #{tpu_custom_call.1} parent=79 // pred_check_branch
          %555 = sbr.rel (%p553) target = $region96
        $region95: #{tpu_custom_call.1} parent=79 // pred_region
          %556 = dma.done [#allocation11], 256
        $region96: #{tpu_custom_call.1} parent=79 // pred_fallthru
          _
        // Predicated region
        $region97: #{tpu_custom_call.1} parent=79 // pred_check
          %p557 = pneg %p220
        $region98: #{tpu_custom_call.1} parent=79 // pred_check_branch
          %559 = sbr.rel (%p557) target = $region100
        $region99: #{tpu_custom_call.1} parent=79 // pred_region
          %560 = dma.done [#allocation11], 256
        $region100: #{tpu_custom_call.1} parent=79 // pred_fallthru
          _
        // Predicated region
        $region101: #{tpu_custom_call.1} parent=79 // pred_check
          %p561 = pneg %p241
        $region102: #{tpu_custom_call.1} parent=79 // pred_check_branch
          %563 = sbr.rel (%p561) target = $region104
        $region103: #{tpu_custom_call.1} parent=79 // pred_region
          %564 = dma.done [#allocation14], 16
        $region104: #{tpu_custom_call.1} parent=79 // pred_fallthru
          _
        // Predicated region
        $region105: #{tpu_custom_call.1} parent=79 // pred_check
          %p565 = pneg %p262
        $region106: #{tpu_custom_call.1} parent=79 // pred_check_branch
          %567 = sbr.rel (%p565) target = $region108
        $region107: #{tpu_custom_call.1} parent=79 // pred_region
          %568 = dma.done [#allocation14], 16
        $region108: #{tpu_custom_call.1} parent=79 // pred_fallthru
          _
        %p569 = scmp.lt.s32.totalorder %s37, 1
        %s570 = scalar_select %p569, %s37, 1
        %s571 = smul.addr %s570, 2
        %s572 = smul.addr %s571, 8
        %s573 = scalar_lea.vmem %s0, %s572
        %p574 = pneg %p66
        %p575 = pneg %p63
        %p576 = scmp.lt.s32.totalorder %s37, 1
        %s577 = scalar_select %p576, %s37, 1
        %p578 = scmp.lt.s32.totalorder %s38, 1
        %s579 = scalar_select %p578, %s38, 1
        %s580 = smul.addr %s577, 2
        %s581 = sadd.s32 %s579, %s580
        %s582 = smul.addr %s581, 8
        %s583 = scalar_lea.vmem %s1, %s582
        %p584 = pneg %p94
        %p585 = pneg %p91
        %p586 = pneg %p115
        %p587 = pneg %p112
        %p588 = pneg %p136
        %p589 = pneg %p133
        %p590 = pneg %p157
        %p591 = pneg %p154
        %p592 = pneg %p178
        %p593 = pneg %p175
        %p594 = pneg %p199
        %p595 = pneg %p196
        %p596 = pneg %p220
        %p597 = pneg %p217
        %p598 = pneg %p241
        %p599 = pneg %p238
        %p600 = pneg %p262
        %p601 = pneg %p259
        %p602 = pneg %p283
        %p603 = pneg %p280
        %p604 = pneg %p304
        %p605 = pneg %p301
        %p606 = pneg %p325
        %p607 = pneg %p322
        %p608 = pneg %p346
        %p609 = pneg %p343
        %p610 = pneg %p367
        %p611 = pneg %p364
        %p612 = pneg %p395
        %p613 = pneg %p392
        %s614 = sand.u32 %s382, 1
        %s615 = scalar_lea.sflag [#allocation6], %s614
        %s616 = sand.u32 %s382, 1
        %s617 = smul.addr %s616, 8
        %s618 = scalar_lea.vmem [#allocation16], %s617
        %p619 = scmp.lt.s32.totalorder %s37, 1
        %s620 = scalar_select %p619, %s37, 1
        %s621 = smul.addr %s620, 2
        %s622 = smul.addr %s621, 8
        %s623 = scalar_lea.vmem %s0, %s622
        %p624 = scmp.lt.s32.totalorder %s37, 1
        %s625 = scalar_select %p624, %s37, 1
        %p626 = scmp.lt.s32.totalorder %s38, 1
        %s627 = scalar_select %p626, %s38, 1
        %s628 = smul.addr %s625, 2
        %s629 = sadd.s32 %s627, %s628
        %s630 = smul.addr %s629, 8
        %s631 = scalar_lea.vmem %s1, %s630
        %v633 = vld [vmem:[%s631] sm:$0xff]
        %v634 = vld [vmem:[#allocation4] sm:$0x1]
        %v635 = vld [vmem:[#allocation7] sm:$0x1]
        %p636 = scmp.eq.s32.totalorder %s38, 0
        // Predicated region
        $region109: #{tpu_custom_call.1} parent=79 // pred_check
          %p637 = pneg %p636
        $region110: #{tpu_custom_call.1} parent=79 // pred_check_branch
          %639 = sbr.rel (%p637) target = $region112
        $region111: #{tpu_custom_call.1} parent=79 // pred_region
          %v640 = vld [vmem:[%s623] sm:$0xff]
          %v641 = vld [vmem:[%s623 + $0x8] sm:$0xff]
          %vm642 = vcmask 261120
          %v643 = vsel %vm642, %v640, 0.0
          %644 = vadd.xlane.f32.xlu0 %v643
          %v645 = vpop.xlane.xlu0 %644
          %v646 = vsel %vm642, %v641, 0.0
          %647 = vadd.xlane.f32.xlu0 %v646
          %v648 = vpop.xlane.xlu0 %647
          %v649 = vrcp.pop 32.0
          %v650 = vmul.f32 %v645, %v649
          %v651 = vmul.f32 %v648, %v649
          %v652 = vsub.f32 %v640, %v650
          %v653 = vsub.f32 %v641, %v651
          %v654 = vmul.f32 %v652, %v652
          %v655 = vmul.f32 %v653, %v653
          %v656 = vsel %vm642, %v654, 0.0
          %657 = vadd.xlane.f32.xlu0 %v656
          %v658 = vpop.xlane.xlu0 %657
          %v659 = vsel %vm642, %v655, 0.0
          %660 = vadd.xlane.f32.xlu0 %v659
          %v661 = vpop.xlane.xlu0 %660
          %v662 = vmul.f32 %v658, %v649
          %v663 = vmul.f32 %v661, %v649
          %v664 = vadd.f32 %v662, 1e-06
          %v665 = vadd.f32 %v663, 1e-06
          %v666 = vrsqrt.pop %v664
          %v667 = vrsqrt.pop %v665
          %v668 = vmul.f32 %v652, %v666
          %v669 = vmul.f32 %v653, %v667
          %v671 = vlaneseq
          %v672 = vshrl.u32 %v671, 7
          %v673 = vsub.s32 0, %v672
          %v674 = vrot.slane %v634, %v673
          %v676 = vmul.f32 %v668, %v674
          %v677 = vmul.f32 %v669, %v674
          %v679 = vlaneseq
          %v680 = vshrl.u32 %v679, 7
          %v681 = vsub.s32 0, %v680
          %v682 = vrot.slane %v635, %v681
          %v684 = vadd.f32 %v676, %v682
          %v685 = vadd.f32 %v677, %v682
          %v686 = vpack.c.bf16 %v685, %v684
          %v687 = vld [vmem:[#allocation9] sm:$0xf]
          %v688 = vld [vmem:[#allocation9 + $0x4] sm:$0xf]
          %v689 = vld [vmem:[#allocation9 + $0x8] sm:$0xf]
          %v690 = vld [vmem:[#allocation9 + $0xc] sm:$0xf]
          %v695 = vunpack.c.l.b16 %v687
          %v696 = vunpack.c.l.b16 %v688
          %v697 = vunpack.c.l.b16 %v689
          %v698 = vunpack.c.l.b16 %v690
          %v699 = vpack.c.b16 %v696, %v695
          %v700 = vpack.c.b16 %v698, %v697
          %v704 = vsel %vm642, %v686, 0
          %706 = vmatprep.subr.bf16.mxu0 0
          %707 = vmatpush1.bf16.msra.mxu0 0
          %708 = vmatprep.subr.bf16.mxu0 0
          %709 = vmatpush1.bf16.msra.mxu0 0
          %710 = vmatprep.subr.bf16.mxu0 0
          %711 = vmatpush1.bf16.msra.mxu0 0
          %712 = vmatprep.subr.bf16.mxu0 0
          %713 = vmatpush1.bf16.msra.mxu0 0
          %714 = vmatprep.subr.bf16.mxu0 0
          %715 = vmatpush1.bf16.msra.mxu0 0
          %716 = vmatprep.subr.bf16.mxu0 0
          %717 = vmatpush1.bf16.msra.mxu0 0
          %718 = vmatprep.subr.bf16.mxu0 0
          %719 = vmatpush1.bf16.msra.mxu0 %v700
          %720 = vmatprep.subr.bf16.mxu0 0
          %721 = vmatpush1.bf16.msra.mxu0 %v699
          %722 = vmatprep.subr.bf16.mxu0 0
          %723 = vmatpush2.bf16.msra.mxu0 0
          %724 = vmatprep.subr.bf16.mxu0 0
          %725 = vmatpush2.bf16.msra.mxu0 0
          %726 = vmatprep.subr.bf16.mxu0 0
          %727 = vmatpush2.bf16.msra.mxu0 0
          %728 = vmatprep.subr.bf16.mxu0 0
          %729 = vmatpush2.bf16.msra.mxu0 0
          %730 = vmatprep.subr.bf16.mxu0 0
          %731 = vmatpush2.bf16.msra.mxu0 0
          %732 = vmatprep.subr.bf16.mxu0 0
          %733 = vmatpush2.bf16.msra.mxu0 0
          %734 = vmatprep.subr.bf16.mxu0 0
          %735 = vmatpush2.bf16.msra.mxu0 0
          %736 = vmatprep.subr.bf16.mxu0 0
          %737 = vmatpush2.bf16.msra.mxu0 0
          %738 = vmatprep.mubr.bf16.mxu0 0
          %739 = vmatmul.mubr.bf16.gmra.mxu0 %v704
          %v740 = vpop.f32.mrf.mxu0
          %v741 = vadd.f32 0.0, %v740
          %v742 = vpop.f32.mrf.mxu0
          %v743 = vpop.f32.mrf.mxu0
          %v744 = vadd.f32 0.0, %v743
          %v745 = vpop.f32.mrf.mxu0
          %746 = vdwg.mxu0
          %v747 = vld [vmem:[#allocation10] sm:$0xf]
          %v748 = vld [vmem:[#allocation10 + $0x4] sm:$0xf]
          %v749 = vld [vmem:[#allocation10 + $0x8] sm:$0xf]
          %v750 = vld [vmem:[#allocation10 + $0xc] sm:$0xf]
          %v755 = vunpack.c.l.b16 %v747
          %v756 = vunpack.c.l.b16 %v748
          %v757 = vunpack.c.l.b16 %v749
          %v758 = vunpack.c.l.b16 %v750
          %v759 = vpack.c.b16 %v756, %v755
          %v760 = vpack.c.b16 %v758, %v757
          %763 = vmatprep.subr.bf16.mxu0 0
          %764 = vmatpush1.bf16.msra.mxu0 0
          %765 = vmatprep.subr.bf16.mxu0 0
          %766 = vmatpush1.bf16.msra.mxu0 0
          %767 = vmatprep.subr.bf16.mxu0 0
          %768 = vmatpush1.bf16.msra.mxu0 0
          %769 = vmatprep.subr.bf16.mxu0 0
          %770 = vmatpush1.bf16.msra.mxu0 0
          %771 = vmatprep.subr.bf16.mxu0 0
          %772 = vmatpush1.bf16.msra.mxu0 0
          %773 = vmatprep.subr.bf16.mxu0 0
          %774 = vmatpush1.bf16.msra.mxu0 0
          %775 = vmatprep.subr.bf16.mxu0 0
          %776 = vmatpush1.bf16.msra.mxu0 %v760
          %777 = vmatprep.subr.bf16.mxu0 0
          %778 = vmatpush1.bf16.msra.mxu0 %v759
          %779 = vmatprep.subr.bf16.mxu0 0
          %780 = vmatpush2.bf16.msra.mxu0 0
          %781 = vmatprep.subr.bf16.mxu0 0
          %782 = vmatpush2.bf16.msra.mxu0 0
          %783 = vmatprep.subr.bf16.mxu0 0
          %784 = vmatpush2.bf16.msra.mxu0 0
          %785 = vmatprep.subr.bf16.mxu0 0
          %786 = vmatpush2.bf16.msra.mxu0 0
          %787 = vmatprep.subr.bf16.mxu0 0
          %788 = vmatpush2.bf16.msra.mxu0 0
          %789 = vmatprep.subr.bf16.mxu0 0
          %790 = vmatpush2.bf16.msra.mxu0 0
          %791 = vmatprep.subr.bf16.mxu0 0
          %792 = vmatpush2.bf16.msra.mxu0 0
          %793 = vmatprep.subr.bf16.mxu0 0
          %794 = vmatpush2.bf16.msra.mxu0 0
          %795 = vmatprep.mubr.bf16.mxu0 0
          %796 = vmatmul.mubr.bf16.gmra.mxu0 %v704
          %v797 = vpop.f32.mrf.mxu0
          %v798 = vadd.f32 0.0, %v797
          %v799 = vpop.f32.mrf.mxu0
          %v800 = vpop.f32.mrf.mxu0
          %v801 = vadd.f32 0.0, %v800
          %v802 = vpop.f32.mrf.mxu0
          %803 = vdwg.mxu0
          %806 = vrot.lane.b32.xlu0 %v741, 120
          %v807 = vpop.permute.xlu0 %806
          %808 = vrot.lane.b32.xlu0 %v744, 120
          %v809 = vpop.permute.xlu0 %808
          %812 = vrot.lane.b32.xlu0 %v741, 112
          %v813 = vpop.permute.xlu0 %812
          %814 = vrot.lane.b32.xlu0 %v744, 112
          %v815 = vpop.permute.xlu0 %814
          %818 = vrot.lane.b32.xlu0 %v741, 104
          %v819 = vpop.permute.xlu0 %818
          %820 = vrot.lane.b32.xlu0 %v744, 104
          %v821 = vpop.permute.xlu0 %820
          %v824 = vpack.c.bf16 %v744, %v741
          %v825 = vpack.c.bf16 %v809, %v807
          %v826 = vpack.c.bf16 %v815, %v813
          %v827 = vpack.c.bf16 %v821, %v819
          %v832 = vunpack.c.l.b16 %v824
          %v833 = vunpack.c.h.b16 %v824
          %v834 = vunpack.c.l.b16 %v825
          %v835 = vunpack.c.h.b16 %v825
          %v836 = vunpack.c.l.b16 %v826
          %v837 = vunpack.c.h.b16 %v826
          %v838 = vunpack.c.l.b16 %v827
          %v839 = vunpack.c.h.b16 %v827
          %v840 = vpack.c.b16 %v832, %v832
          %v841 = vpack.c.b16 %v833, %v833
          %v842 = vpack.c.b16 %v834, %v834
          %v843 = vpack.c.b16 %v835, %v835
          %v844 = vpack.c.b16 %v836, %v836
          %v845 = vpack.c.b16 %v837, %v837
          %v846 = vpack.c.b16 %v838, %v838
          %v847 = vpack.c.b16 %v839, %v839
          %vm856 = vcmask 60416
          %857 = vst.msk [vmem:[#allocation2] sm:$0xf] %vm856, %v840
          %858 = vst.msk [vmem:[#allocation2 + $0x4] sm:$0xf] %vm856, %v841
          %859 = vst.msk [vmem:[#allocation2 + $0x8] sm:$0xf] %vm856, %v842
          %860 = vst.msk [vmem:[#allocation2 + $0xc] sm:$0xf] %vm856, %v843
          %861 = vst.msk [vmem:[#allocation2 + $0x10] sm:$0xf] %vm856, %v844
          %862 = vst.msk [vmem:[#allocation2 + $0x14] sm:$0xf] %vm856, %v845
          %863 = vst.msk [vmem:[#allocation2 + $0x18] sm:$0xf] %vm856, %v846
          %864 = vst.msk [vmem:[#allocation2 + $0x1c] sm:$0xf] %vm856, %v847
          %867 = vrot.lane.b32.xlu0 %v798, 120
          %v868 = vpop.permute.xlu0 %867
          %869 = vrot.lane.b32.xlu0 %v801, 120
          %v870 = vpop.permute.xlu0 %869
          %873 = vrot.lane.b32.xlu0 %v798, 112
          %v874 = vpop.permute.xlu0 %873
          %875 = vrot.lane.b32.xlu0 %v801, 112
          %v876 = vpop.permute.xlu0 %875
          %879 = vrot.lane.b32.xlu0 %v798, 104
          %v880 = vpop.permute.xlu0 %879
          %881 = vrot.lane.b32.xlu0 %v801, 104
          %v882 = vpop.permute.xlu0 %881
          %v885 = vpack.c.bf16 %v801, %v798
          %v886 = vpack.c.bf16 %v870, %v868
          %v887 = vpack.c.bf16 %v876, %v874
          %v888 = vpack.c.bf16 %v882, %v880
          %v893 = vunpack.c.l.b16 %v885
          %v894 = vunpack.c.h.b16 %v885
          %v895 = vunpack.c.l.b16 %v886
          %v896 = vunpack.c.h.b16 %v886
          %v897 = vunpack.c.l.b16 %v887
          %v898 = vunpack.c.h.b16 %v887
          %v899 = vunpack.c.l.b16 %v888
          %v900 = vunpack.c.h.b16 %v888
          %v901 = vpack.c.b16 %v893, %v893
          %v902 = vpack.c.b16 %v894, %v894
          %v903 = vpack.c.b16 %v895, %v895
          %v904 = vpack.c.b16 %v896, %v896
          %v905 = vpack.c.b16 %v897, %v897
          %v906 = vpack.c.b16 %v898, %v898
          %v907 = vpack.c.b16 %v899, %v899
          %v908 = vpack.c.b16 %v900, %v900
          %917 = vst.msk [vmem:[#allocation3] sm:$0xf] %vm856, %v901
          %918 = vst.msk [vmem:[#allocation3 + $0x4] sm:$0xf] %vm856, %v902
          %919 = vst.msk [vmem:[#allocation3 + $0x8] sm:$0xf] %vm856, %v903
          %920 = vst.msk [vmem:[#allocation3 + $0xc] sm:$0xf] %vm856, %v904
          %921 = vst.msk [vmem:[#allocation3 + $0x10] sm:$0xf] %vm856, %v905
          %922 = vst.msk [vmem:[#allocation3 + $0x14] sm:$0xf] %vm856, %v906
          %923 = vst.msk [vmem:[#allocation3 + $0x18] sm:$0xf] %vm856, %v907
          %924 = vst.msk [vmem:[#allocation3 + $0x1c] sm:$0xf] %vm856, %v908
        $region112: #{tpu_custom_call.1} parent=79 // pred_fallthru
          _
        %vm925 = vcmask 261120
        %v926 = vsel %vm925, %v633, 0.0
        %927 = vadd.xlane.f32.xlu0 %v926
        %v928 = vpop.xlane.xlu0 %927
        %v929 = vrcp.pop 32.0
        %v930 = vmul.f32 %v928, %v929
        %v931 = vsub.f32 %v633, %v930
        %v932 = vmul.f32 %v931, %v931
        %v933 = vsel %vm925, %v932, 0.0
        %934 = vadd.xlane.f32.xlu0 %v933
        %v935 = vpop.xlane.xlu0 %934
        %v936 = vmul.f32 %v935, %v929
        %v937 = vadd.f32 %v936, 1e-06
        %v938 = vrsqrt.pop %v937
        %v939 = vmul.f32 %v931, %v938
        %v941 = vlaneseq
        %v942 = vshrl.u32 %v941, 7
        %v943 = vsub.s32 0, %v942
        %v944 = vrot.slane %v634, %v943
        %v946 = vmul.f32 %v939, %v944
        %v948 = vlaneseq
        %v949 = vshrl.u32 %v948, 7
        %v950 = vsub.s32 0, %v949
        %v951 = vrot.slane %v635, %v950
        %v953 = vadd.f32 %v946, %v951
        %v954 = vpack.c.bf16 %v953, %v953
        %v955 = vld [vmem:[%s4] sm:$0xf]
        %v956 = vld [vmem:[%s4 + $0x4] sm:$0xf]
        %v957 = vld [vmem:[%s4 + $0x8] sm:$0xf]
        %v958 = vld [vmem:[%s4 + $0xc] sm:$0xf]
        %v963 = vunpack.c.l.b16 %v955
        %v964 = vunpack.c.l.b16 %v956
        %v965 = vunpack.c.l.b16 %v957
        %v966 = vunpack.c.l.b16 %v958
        %v967 = vpack.c.b16 %v964, %v963
        %v968 = vpack.c.b16 %v966, %v965
        %v972 = vsel %vm925, %v954, 0
        %974 = vmatprep.subr.bf16.mxu0 0
        %975 = vmatpush1.bf16.msra.mxu0 0
        %976 = vmatprep.subr.bf16.mxu0 0
        %977 = vmatpush1.bf16.msra.mxu0 0
        %978 = vmatprep.subr.bf16.mxu0 0
        %979 = vmatpush1.bf16.msra.mxu0 0
        %980 = vmatprep.subr.bf16.mxu0 0
        %981 = vmatpush1.bf16.msra.mxu0 0
        %982 = vmatprep.subr.bf16.mxu0 0
        %983 = vmatpush1.bf16.msra.mxu0 0
        %984 = vmatprep.subr.bf16.mxu0 0
        %985 = vmatpush1.bf16.msra.mxu0 0
        %986 = vmatprep.subr.bf16.mxu0 0
        %987 = vmatpush1.bf16.msra.mxu0 %v968
        %988 = vmatprep.subr.bf16.mxu0 0
        %989 = vmatpush1.bf16.msra.mxu0 %v967
        %990 = vmatprep.subr.bf16.mxu0 0
        %991 = vmatpush2.bf16.msra.mxu0 0
        %992 = vmatprep.subr.bf16.mxu0 0
        %993 = vmatpush2.bf16.msra.mxu0 0
        %994 = vmatprep.subr.bf16.mxu0 0
        %995 = vmatpush2.bf16.msra.mxu0 0
        %996 = vmatprep.subr.bf16.mxu0 0
        %997 = vmatpush2.bf16.msra.mxu0 0
        %998 = vmatprep.subr.bf16.mxu0 0
        %999 = vmatpush2.bf16.msra.mxu0 0
        %1000 = vmatprep.subr.bf16.mxu0 0
        %1001 = vmatpush2.bf16.msra.mxu0 0
        %1002 = vmatprep.subr.bf16.mxu0 0
        %1003 = vmatpush2.bf16.msra.mxu0 0
        %1004 = vmatprep.subr.bf16.mxu0 0
        %1005 = vmatpush2.bf16.msra.mxu0 0
        %1006 = vmatprep.mubr.bf16.mxu0 0
        %1007 = vmatmul.mubr.bf16.gmra.mxu0 %v972
        %v1008 = vpop.f32.mrf.mxu0
        %v1009 = vadd.f32 0.0, %v1008
        %v1010 = vpop.f32.mrf.mxu0
        %v1011 = vpop.f32.mrf.mxu0
        %v1012 = vpop.f32.mrf.mxu0
        %1013 = vdwg.mxu0
        %v1014 = vmul.f32 %v1009, 0.35355338
        %1016 = vrot.lane.b32.xlu0 %v1014, 120
        %v1017 = vpop.permute.xlu0 %1016
        %1019 = vrot.lane.b32.xlu0 %v1014, 112
        %v1020 = vpop.permute.xlu0 %1019
        %1022 = vrot.lane.b32.xlu0 %v1014, 104
        %v1023 = vpop.permute.xlu0 %1022
        %v1025 = vpack.c.bf16 %v1014, %v1014
        %v1026 = vpack.c.bf16 %v1017, %v1017
        %v1027 = vpack.c.bf16 %v1020, %v1020
        %v1028 = vpack.c.bf16 %v1023, %v1023
        %v1029 = vld [vmem:[#allocation2] sm:$0xf]
        %v1030 = vld [vmem:[#allocation2 + $0x4] sm:$0xf]
        %v1031 = vld [vmem:[#allocation2 + $0x8] sm:$0xf]
        %v1032 = vld [vmem:[#allocation2 + $0xc] sm:$0xf]
        %v1033 = vld [vmem:[#allocation2 + $0x10] sm:$0xf]
        %v1034 = vld [vmem:[#allocation2 + $0x14] sm:$0xf]
        %v1035 = vld [vmem:[#allocation2 + $0x18] sm:$0xf]
        %v1036 = vld [vmem:[#allocation2 + $0x1c] sm:$0xf]
        %v1039 = vunpack.c.l.b16 %v1029
        %v1040 = vunpack.c.l.b16 %v1030
        %v1041 = vpack.c.b16 %v1040, %v1039
        %vm1042 = vcmask 64512
        %v1044 = vsel %vm1042, %v1025, 0
        %v1047 = vsel %vm1042, %v1041, 0
        %1049 = vmatprep.subr.bf16.mxu0 0
        %1050 = vmatpush1.bf16.xpose.msra.mxu0 0
        %1051 = vmatprep.subr.bf16.mxu0 0
        %1052 = vmatpush1.bf16.xpose.msra.mxu0 0
        %1053 = vmatprep.subr.bf16.mxu0 0
        %1054 = vmatpush1.bf16.xpose.msra.mxu0 0
        %1055 = vmatprep.subr.bf16.mxu0 0
        %1056 = vmatpush1.bf16.xpose.msra.mxu0 0
        %1057 = vmatprep.subr.bf16.mxu0 0
        %1058 = vmatpush1.bf16.xpose.msra.mxu0 0
        %1059 = vmatprep.subr.bf16.mxu0 0
        %1060 = vmatpush1.bf16.xpose.msra.mxu0 0
        %1061 = vmatprep.subr.bf16.mxu0 0
        %1062 = vmatpush1.bf16.xpose.msra.mxu0 0
        %1063 = vmatprep.subr.bf16.mxu0 0
        %1064 = vmatpush1.bf16.xpose.msra.mxu0 %v1047
        %1065 = vmatprep.subr.bf16.mxu0 0
        %1066 = vmatpush2.bf16.xpose.msra.mxu0 0
        %1067 = vmatprep.subr.bf16.mxu0 0
        %1068 = vmatpush2.bf16.xpose.msra.mxu0 0
        %1069 = vmatprep.subr.bf16.mxu0 0
        %1070 = vmatpush2.bf16.xpose.msra.mxu0 0
        %1071 = vmatprep.subr.bf16.mxu0 0
        %1072 = vmatpush2.bf16.xpose.msra.mxu0 0
        %1073 = vmatprep.subr.bf16.mxu0 0
        %1074 = vmatpush2.bf16.xpose.msra.mxu0 0
        %1075 = vmatprep.subr.bf16.mxu0 0
        %1076 = vmatpush2.bf16.xpose.msra.mxu0 0
        %1077 = vmatprep.subr.bf16.mxu0 0
        %1078 = vmatpush2.bf16.xpose.msra.mxu0 0
        %1079 = vmatprep.subr.bf16.mxu0 0
        %1080 = vmatpush2.bf16.xpose.msra.mxu0 0
        %1081 = vmatprep.mubr.bf16.mxu0 0
        %1082 = vmatmul.mubr.bf16.gmra.mxu0 %v1044
        %v1083 = vpop.f32.mrf.mxu0
        %v1084 = vadd.f32 0.0, %v1083
        %v1085 = vpop.f32.mrf.mxu0
        %v1086 = vpop.f32.mrf.mxu0
        %v1087 = vpop.f32.mrf.mxu0
        %1088 = vdwg.mxu0
        %v1091 = vunpack.c.l.b16 %v1031
        %v1092 = vunpack.c.l.b16 %v1032
        %v1093 = vpack.c.b16 %v1092, %v1091
        %v1095 = vsel %vm1042, %v1026, 0
        %v1098 = vsel %vm1042, %v1093, 0
        %1100 = vmatprep.subr.bf16.mxu0 0
        %1101 = vmatpush1.bf16.xpose.msra.mxu0 0
        %1102 = vmatprep.subr.bf16.mxu0 0
        %1103 = vmatpush1.bf16.xpose.msra.mxu0 0
        %1104 = vmatprep.subr.bf16.mxu0 0
        %1105 = vmatpush1.bf16.xpose.msra.mxu0 0
        %1106 = vmatprep.subr.bf16.mxu0 0
        %1107 = vmatpush1.bf16.xpose.msra.mxu0 0
        %1108 = vmatprep.subr.bf16.mxu0 0
        %1109 = vmatpush1.bf16.xpose.msra.mxu0 0
        %1110 = vmatprep.subr.bf16.mxu0 0
        %1111 = vmatpush1.bf16.xpose.msra.mxu0 0
        %1112 = vmatprep.subr.bf16.mxu0 0
        %1113 = vmatpush1.bf16.xpose.msra.mxu0 0
        %1114 = vmatprep.subr.bf16.mxu0 0
        %1115 = vmatpush1.bf16.xpose.msra.mxu0 %v1098
        %1116 = vmatprep.subr.bf16.mxu0 0
        %1117 = vmatpush2.bf16.xpose.msra.mxu0 0
        %1118 = vmatprep.subr.bf16.mxu0 0
        %1119 = vmatpush2.bf16.xpose.msra.mxu0 0
        %1120 = vmatprep.subr.bf16.mxu0 0
        %1121 = vmatpush2.bf16.xpose.msra.mxu0 0
        %1122 = vmatprep.subr.bf16.mxu0 0
        %1123 = vmatpush2.bf16.xpose.msra.mxu0 0
        %1124 = vmatprep.subr.bf16.mxu0 0
        %1125 = vmatpush2.bf16.xpose.msra.mxu0 0
        %1126 = vmatprep.subr.bf16.mxu0 0
        %1127 = vmatpush2.bf16.xpose.msra.mxu0 0
        %1128 = vmatprep.subr.bf16.mxu0 0
        %1129 = vmatpush2.bf16.xpose.msra.mxu0 0
        %1130 = vmatprep.subr.bf16.mxu0 0
        %1131 = vmatpush2.bf16.xpose.msra.mxu0 0
        %1132 = vmatprep.mubr.bf16.mxu0 0
        %1133 = vmatmul.mubr.bf16.gmra.mxu0 %v1095
        %v1134 = vpop.f32.mrf.mxu0
        %v1135 = vadd.f32 0.0, %v1134
        %v1136 = vpop.f32.mrf.mxu0
        %v1137 = vpop.f32.mrf.mxu0
        %v1138 = vpop.f32.mrf.mxu0
        %1139 = vdwg.mxu0
        %v1142 = vunpack.c.l.b16 %v1033
        %v1143 = vunpack.c.l.b16 %v1034
        %v1144 = vpack.c.b16 %v1143, %v1142
        %v1146 = vsel %vm1042, %v1027, 0
        %v1149 = vsel %vm1042, %v1144, 0
        %1151 = vmatprep.subr.bf16.mxu0 0
        %1152 = vmatpush1.bf16.xpose.msra.mxu0 0
        %1153 = vmatprep.subr.bf16.mxu0 0
        %1154 = vmatpush1.bf16.xpose.msra.mxu0 0
        %1155 = vmatprep.subr.bf16.mxu0 0
        %1156 = vmatpush1.bf16.xpose.msra.mxu0 0
        %1157 = vmatprep.subr.bf16.mxu0 0
        %1158 = vmatpush1.bf16.xpose.msra.mxu0 0
        %1159 = vmatprep.subr.bf16.mxu0 0
        %1160 = vmatpush1.bf16.xpose.msra.mxu0 0
        %1161 = vmatprep.subr.bf16.mxu0 0
        %1162 = vmatpush1.bf16.xpose.msra.mxu0 0
        %1163 = vmatprep.subr.bf16.mxu0 0
        %1164 = vmatpush1.bf16.xpose.msra.mxu0 0
        %1165 = vmatprep.subr.bf16.mxu0 0
        %1166 = vmatpush1.bf16.xpose.msra.mxu0 %v1149
        %1167 = vmatprep.subr.bf16.mxu0 0
        %1168 = vmatpush2.bf16.xpose.msra.mxu0 0
        %1169 = vmatprep.subr.bf16.mxu0 0
        %1170 = vmatpush2.bf16.xpose.msra.mxu0 0
        %1171 = vmatprep.subr.bf16.mxu0 0
        %1172 = vmatpush2.bf16.xpose.msra.mxu0 0
        %1173 = vmatprep.subr.bf16.mxu0 0
        %1174 = vmatpush2.bf16.xpose.msra.mxu0 0
        %1175 = vmatprep.subr.bf16.mxu0 0
        %1176 = vmatpush2.bf16.xpose.msra.mxu0 0
        %1177 = vmatprep.subr.bf16.mxu0 0
        %1178 = vmatpush2.bf16.xpose.msra.mxu0 0
        %1179 = vmatprep.subr.bf16.mxu0 0
        %1180 = vmatpush2.bf16.xpose.msra.mxu0 0
        %1181 = vmatprep.subr.bf16.mxu0 0
        %1182 = vmatpush2.bf16.xpose.msra.mxu0 0
        %1183 = vmatprep.mubr.bf16.mxu0 0
        %1184 = vmatmul.mubr.bf16.gmra.mxu0 %v1146
        %v1185 = vpop.f32.mrf.mxu0
        %v1186 = vadd.f32 0.0, %v1185
        %v1187 = vpop.f32.mrf.mxu0
        %v1188 = vpop.f32.mrf.mxu0
        %v1189 = vpop.f32.mrf.mxu0
        %1190 = vdwg.mxu0
        %v1193 = vunpack.c.l.b16 %v1035
        %v1194 = vunpack.c.l.b16 %v1036
        %v1195 = vpack.c.b16 %v1194, %v1193
        %v1197 = vsel %vm1042, %v1028, 0
        %v1200 = vsel %vm1042, %v1195, 0
        %1202 = vmatprep.subr.bf16.mxu0 0
        %1203 = vmatpush1.bf16.xpose.msra.mxu0 0
        %1204 = vmatprep.subr.bf16.mxu0 0
        %1205 = vmatpush1.bf16.xpose.msra.mxu0 0
        %1206 = vmatprep.subr.bf16.mxu0 0
        %1207 = vmatpush1.bf16.xpose.msra.mxu0 0
        %1208 = vmatprep.subr.bf16.mxu0 0
        %1209 = vmatpush1.bf16.xpose.msra.mxu0 0
        %1210 = vmatprep.subr.bf16.mxu0 0
        %1211 = vmatpush1.bf16.xpose.msra.mxu0 0
        %1212 = vmatprep.subr.bf16.mxu0 0
        %1213 = vmatpush1.bf16.xpose.msra.mxu0 0
        %1214 = vmatprep.subr.bf16.mxu0 0
        %1215 = vmatpush1.bf16.xpose.msra.mxu0 0
        %1216 = vmatprep.subr.bf16.mxu0 0
        %1217 = vmatpush1.bf16.xpose.msra.mxu0 %v1200
        %1218 = vmatprep.subr.bf16.mxu0 0
        %1219 = vmatpush2.bf16.xpose.msra.mxu0 0
        %1220 = vmatprep.subr.bf16.mxu0 0
        %1221 = vmatpush2.bf16.xpose.msra.mxu0 0
        %1222 = vmatprep.subr.bf16.mxu0 0
        %1223 = vmatpush2.bf16.xpose.msra.mxu0 0
        %1224 = vmatprep.subr.bf16.mxu0 0
        %1225 = vmatpush2.bf16.xpose.msra.mxu0 0
        %1226 = vmatprep.subr.bf16.mxu0 0
        %1227 = vmatpush2.bf16.xpose.msra.mxu0 0
        %1228 = vmatprep.subr.bf16.mxu0 0
        %1229 = vmatpush2.bf16.xpose.msra.mxu0 0
        %1230 = vmatprep.subr.bf16.mxu0 0
        %1231 = vmatpush2.bf16.xpose.msra.mxu0 0
        %1232 = vmatprep.subr.bf16.mxu0 0
        %1233 = vmatpush2.bf16.xpose.msra.mxu0 0
        %1234 = vmatprep.mubr.bf16.mxu0 0
        %1235 = vmatmul.mubr.bf16.gmra.mxu0 %v1197
        %v1236 = vpop.f32.mrf.mxu0
        %v1237 = vadd.f32 0.0, %v1236
        %v1238 = vpop.f32.mrf.mxu0
        %v1239 = vpop.f32.mrf.mxu0
        %v1240 = vpop.f32.mrf.mxu0
        %1241 = vdwg.mxu0
        %vm1242 = vcmask 130048
        %v1243 = vsel %vm1242, %v1084, -inf
        %1244 = vmax.xlane.f32.xlu0 %v1243
        %v1245 = vpop.xlane.xlu0 %1244
        %v1246 = vsel %vm1242, %v1135, -inf
        %1247 = vmax.xlane.f32.xlu0 %v1246
        %v1248 = vpop.xlane.xlu0 %1247
        %v1249 = vsel %vm1242, %v1186, -inf
        %1250 = vmax.xlane.f32.xlu0 %v1249
        %v1251 = vpop.xlane.xlu0 %1250
        %v1252 = vsel %vm1242, %v1237, -inf
        %1253 = vmax.xlane.f32.xlu0 %v1252
        %v1254 = vpop.xlane.xlu0 %1253
        %v1255 = vsub.f32 %v1084, %v1245
        %v1256 = vsub.f32 %v1135, %v1248
        %v1257 = vsub.f32 %v1186, %v1251
        %v1258 = vsub.f32 %v1237, %v1254
        %v1259 = vmul.f32 %v1255, 1.442695
        %v1260 = vpow.pop %v1259
        %v1261 = vmul.f32 %v1256, 1.442695
        %v1262 = vpow.pop %v1261
        %v1263 = vmul.f32 %v1257, 1.442695
        %v1264 = vpow.pop %v1263
        %v1265 = vmul.f32 %v1258, 1.442695
        %v1266 = vpow.pop %v1265
        %v1267 = vsel %vm1242, %v1260, 0.0
        %1268 = vadd.xlane.f32.xlu0 %v1267
        %v1269 = vpop.xlane.xlu0 %1268
        %v1270 = vsel %vm1242, %v1262, 0.0
        %1271 = vadd.xlane.f32.xlu0 %v1270
        %v1272 = vpop.xlane.xlu0 %1271
        %v1273 = vsel %vm1242, %v1264, 0.0
        %1274 = vadd.xlane.f32.xlu0 %v1273
        %v1275 = vpop.xlane.xlu0 %1274
        %v1276 = vsel %vm1242, %v1266, 0.0
        %1277 = vadd.xlane.f32.xlu0 %v1276
        %v1278 = vpop.xlane.xlu0 %1277
        %v1279 = vrcp.pop %v1269
        %v1280 = vrcp.pop %v1272
        %v1281 = vrcp.pop %v1275
        %v1282 = vrcp.pop %v1278
        %v1283 = vmul.f32 %v1260, %v1279
        %v1284 = vmul.f32 %v1262, %v1280
        %v1285 = vmul.f32 %v1264, %v1281
        %v1286 = vmul.f32 %v1266, %v1282
        %v1287 = vpack.c.bf16 %v1283, %v1283
        %v1288 = vpack.c.bf16 %v1284, %v1284
        %v1289 = vpack.c.bf16 %v1285, %v1285
        %v1290 = vpack.c.bf16 %v1286, %v1286
        %v1291 = vld [vmem:[#allocation3] sm:$0xf]
        %v1292 = vld [vmem:[#allocation3 + $0x4] sm:$0xf]
        %v1293 = vld [vmem:[#allocation3 + $0x8] sm:$0xf]
        %v1294 = vld [vmem:[#allocation3 + $0xc] sm:$0xf]
        %v1295 = vld [vmem:[#allocation3 + $0x10] sm:$0xf]
        %v1296 = vld [vmem:[#allocation3 + $0x14] sm:$0xf]
        %v1297 = vld [vmem:[#allocation3 + $0x18] sm:$0xf]
        %v1298 = vld [vmem:[#allocation3 + $0x1c] sm:$0xf]
        %v1301 = vunpack.c.l.b16 %v1291
        %v1302 = vunpack.c.l.b16 %v1292
        %v1303 = vpack.c.b16 %v1302, %v1301
        %v1306 = vsel %vm1242, %v1287, 0
        %1308 = vmatprep.subr.bf16.mxu0 0
        %1309 = vmatpush1.bf16.msra.mxu0 0
        %1310 = vmatprep.subr.bf16.mxu0 0
        %1311 = vmatpush1.bf16.msra.mxu0 0
        %1312 = vmatprep.subr.bf16.mxu0 0
        %1313 = vmatpush1.bf16.msra.mxu0 0
        %1314 = vmatprep.subr.bf16.mxu0 0
        %1315 = vmatpush1.bf16.msra.mxu0 0
        %1316 = vmatprep.subr.bf16.mxu0 0
        %1317 = vmatpush1.bf16.msra.mxu0 0
        %1318 = vmatprep.subr.bf16.mxu0 0
        %1319 = vmatpush1.bf16.msra.mxu0 0
        %1320 = vmatprep.subr.bf16.mxu0 0
        %1321 = vmatpush1.bf16.msra.mxu0 0
        %1322 = vmatprep.subr.bf16.mxu0 0
        %1323 = vmatpush1.bf16.msra.mxu0 %v1303
        %1324 = vmatprep.subr.bf16.mxu0 0
        %1325 = vmatpush2.bf16.msra.mxu0 0
        %1326 = vmatprep.subr.bf16.mxu0 0
        %1327 = vmatpush2.bf16.msra.mxu0 0
        %1328 = vmatprep.subr.bf16.mxu0 0
        %1329 = vmatpush2.bf16.msra.mxu0 0
        %1330 = vmatprep.subr.bf16.mxu0 0
        %1331 = vmatpush2.bf16.msra.mxu0 0
        %1332 = vmatprep.subr.bf16.mxu0 0
        %1333 = vmatpush2.bf16.msra.mxu0 0
        %1334 = vmatprep.subr.bf16.mxu0 0
        %1335 = vmatpush2.bf16.msra.mxu0 0
        %1336 = vmatprep.subr.bf16.mxu0 0
        %1337 = vmatpush2.bf16.msra.mxu0 0
        %1338 = vmatprep.subr.bf16.mxu0 0
        %1339 = vmatpush2.bf16.msra.mxu0 0
        %1340 = vmatprep.mubr.bf16.mxu0 0
        %1341 = vmatmul.mubr.bf16.gmra.mxu0 %v1306
        %v1342 = vpop.f32.mrf.mxu0
        %v1343 = vadd.f32 0.0, %v1342
        %v1344 = vpop.f32.mrf.mxu0
        %v1345 = vpop.f32.mrf.mxu0
        %v1346 = vpop.f32.mrf.mxu0
        %1347 = vdwg.mxu0
        %v1350 = vunpack.c.l.b16 %v1293
        %v1351 = vunpack.c.l.b16 %v1294
        %v1352 = vpack.c.b16 %v1351, %v1350
        %v1355 = vsel %vm1242, %v1288, 0
        %1357 = vmatprep.subr.bf16.mxu0 0
        %1358 = vmatpush1.bf16.msra.mxu0 0
        %1359 = vmatprep.subr.bf16.mxu0 0
        %1360 = vmatpush1.bf16.msra.mxu0 0
        %1361 = vmatprep.subr.bf16.mxu0 0
        %1362 = vmatpush1.bf16.msra.mxu0 0
        %1363 = vmatprep.subr.bf16.mxu0 0
        %1364 = vmatpush1.bf16.msra.mxu0 0
        %1365 = vmatprep.subr.bf16.mxu0 0
        %1366 = vmatpush1.bf16.msra.mxu0 0
        %1367 = vmatprep.subr.bf16.mxu0 0
        %1368 = vmatpush1.bf16.msra.mxu0 0
        %1369 = vmatprep.subr.bf16.mxu0 0
        %1370 = vmatpush1.bf16.msra.mxu0 0
        %1371 = vmatprep.subr.bf16.mxu0 0
        %1372 = vmatpush1.bf16.msra.mxu0 %v1352
        %1373 = vmatprep.subr.bf16.mxu0 0
        %1374 = vmatpush2.bf16.msra.mxu0 0
        %1375 = vmatprep.subr.bf16.mxu0 0
        %1376 = vmatpush2.bf16.msra.mxu0 0
        %1377 = vmatprep.subr.bf16.mxu0 0
        %1378 = vmatpush2.bf16.msra.mxu0 0
        %1379 = vmatprep.subr.bf16.mxu0 0
        %1380 = vmatpush2.bf16.msra.mxu0 0
        %1381 = vmatprep.subr.bf16.mxu0 0
        %1382 = vmatpush2.bf16.msra.mxu0 0
        %1383 = vmatprep.subr.bf16.mxu0 0
        %1384 = vmatpush2.bf16.msra.mxu0 0
        %1385 = vmatprep.subr.bf16.mxu0 0
        %1386 = vmatpush2.bf16.msra.mxu0 0
        %1387 = vmatprep.subr.bf16.mxu0 0
        %1388 = vmatpush2.bf16.msra.mxu0 0
        %1389 = vmatprep.mubr.bf16.mxu0 0
        %1390 = vmatmul.mubr.bf16.gmra.mxu0 %v1355
        %v1391 = vpop.f32.mrf.mxu0
        %v1392 = vadd.f32 0.0, %v1391
        %v1393 = vpop.f32.mrf.mxu0
        %v1394 = vpop.f32.mrf.mxu0
        %v1395 = vpop.f32.mrf.mxu0
        %1396 = vdwg.mxu0
        %v1399 = vunpack.c.l.b16 %v1295
        %v1400 = vunpack.c.l.b16 %v1296
        %v1401 = vpack.c.b16 %v1400, %v1399
        %v1404 = vsel %vm1242, %v1289, 0
        %1406 = vmatprep.subr.bf16.mxu0 0
        %1407 = vmatpush1.bf16.msra.mxu0 0
        %1408 = vmatprep.subr.bf16.mxu0 0
        %1409 = vmatpush1.bf16.msra.mxu0 0
        %1410 = vmatprep.subr.bf16.mxu0 0
        %1411 = vmatpush1.bf16.msra.mxu0 0
        %1412 = vmatprep.subr.bf16.mxu0 0
        %1413 = vmatpush1.bf16.msra.mxu0 0
        %1414 = vmatprep.subr.bf16.mxu0 0
        %1415 = vmatpush1.bf16.msra.mxu0 0
        %1416 = vmatprep.subr.bf16.mxu0 0
        %1417 = vmatpush1.bf16.msra.mxu0 0
        %1418 = vmatprep.subr.bf16.mxu0 0
        %1419 = vmatpush1.bf16.msra.mxu0 0
        %1420 = vmatprep.subr.bf16.mxu0 0
        %1421 = vmatpush1.bf16.msra.mxu0 %v1401
        %1422 = vmatprep.subr.bf16.mxu0 0
        %1423 = vmatpush2.bf16.msra.mxu0 0
        %1424 = vmatprep.subr.bf16.mxu0 0
        %1425 = vmatpush2.bf16.msra.mxu0 0
        %1426 = vmatprep.subr.bf16.mxu0 0
        %1427 = vmatpush2.bf16.msra.mxu0 0
        %1428 = vmatprep.subr.bf16.mxu0 0
        %1429 = vmatpush2.bf16.msra.mxu0 0
        %1430 = vmatprep.subr.bf16.mxu0 0
        %1431 = vmatpush2.bf16.msra.mxu0 0
        %1432 = vmatprep.subr.bf16.mxu0 0
        %1433 = vmatpush2.bf16.msra.mxu0 0
        %1434 = vmatprep.subr.bf16.mxu0 0
        %1435 = vmatpush2.bf16.msra.mxu0 0
        %1436 = vmatprep.subr.bf16.mxu0 0
        %1437 = vmatpush2.bf16.msra.mxu0 0
        %1438 = vmatprep.mubr.bf16.mxu0 0
        %1439 = vmatmul.mubr.bf16.gmra.mxu0 %v1404
        %v1440 = vpop.f32.mrf.mxu0
        %v1441 = vadd.f32 0.0, %v1440
        %v1442 = vpop.f32.mrf.mxu0
        %v1443 = vpop.f32.mrf.mxu0
        %v1444 = vpop.f32.mrf.mxu0
        %1445 = vdwg.mxu0
        %v1448 = vunpack.c.l.b16 %v1297
        %v1449 = vunpack.c.l.b16 %v1298
        %v1450 = vpack.c.b16 %v1449, %v1448
        %v1453 = vsel %vm1242, %v1290, 0
        %1455 = vmatprep.subr.bf16.mxu0 0
        %1456 = vmatpush1.bf16.msra.mxu0 0
        %1457 = vmatprep.subr.bf16.mxu0 0
        %1458 = vmatpush1.bf16.msra.mxu0 0
        %1459 = vmatprep.subr.bf16.mxu0 0
        %1460 = vmatpush1.bf16.msra.mxu0 0
        %1461 = vmatprep.subr.bf16.mxu0 0
        %1462 = vmatpush1.bf16.msra.mxu0 0
        %1463 = vmatprep.subr.bf16.mxu0 0
        %1464 = vmatpush1.bf16.msra.mxu0 0
        %1465 = vmatprep.subr.bf16.mxu0 0
        %1466 = vmatpush1.bf16.msra.mxu0 0
        %1467 = vmatprep.subr.bf16.mxu0 0
        %1468 = vmatpush1.bf16.msra.mxu0 0
        %1469 = vmatprep.subr.bf16.mxu0 0
        %1470 = vmatpush1.bf16.msra.mxu0 %v1450
        %1471 = vmatprep.subr.bf16.mxu0 0
        %1472 = vmatpush2.bf16.msra.mxu0 0
        %1473 = vmatprep.subr.bf16.mxu0 0
        %1474 = vmatpush2.bf16.msra.mxu0 0
        %1475 = vmatprep.subr.bf16.mxu0 0
        %1476 = vmatpush2.bf16.msra.mxu0 0
        %1477 = vmatprep.subr.bf16.mxu0 0
        %1478 = vmatpush2.bf16.msra.mxu0 0
        %1479 = vmatprep.subr.bf16.mxu0 0
        %1480 = vmatpush2.bf16.msra.mxu0 0
        %1481 = vmatprep.subr.bf16.mxu0 0
        %1482 = vmatpush2.bf16.msra.mxu0 0
        %1483 = vmatprep.subr.bf16.mxu0 0
        %1484 = vmatpush2.bf16.msra.mxu0 0
        %1485 = vmatprep.subr.bf16.mxu0 0
        %1486 = vmatpush2.bf16.msra.mxu0 0
        %1487 = vmatprep.mubr.bf16.mxu0 0
        %1488 = vmatmul.mubr.bf16.gmra.mxu0 %v1453
        %v1489 = vpop.f32.mrf.mxu0
        %v1490 = vadd.f32 0.0, %v1489
        %v1491 = vpop.f32.mrf.mxu0
        %v1492 = vpop.f32.mrf.mxu0
        %v1493 = vpop.f32.mrf.mxu0
        %1494 = vdwg.mxu0
        %v1495 = vpack.c.bf16 %v1343, %v1343
        %v1496 = vpack.c.bf16 %v1392, %v1392
        %v1497 = vpack.c.bf16 %v1441, %v1441
        %v1498 = vpack.c.bf16 %v1490, %v1490
        %v1499 = vld [vmem:[#allocation12] sm:$0xf]
        %v1500 = vld [vmem:[#allocation12 + $0x4] sm:$0xf]
        %v1501 = vld [vmem:[#allocation12 + $0x8] sm:$0xf]
        %v1502 = vld [vmem:[#allocation12 + $0xc] sm:$0xf]
        %v1504 = vsel %vm1042, %v1495, 0
        %vm1506 = vcmask 1043456
        %v1508 = vsel %vm1506, %v1499, 0
        %1510 = vmatprep.subr.bf16.mxu0 0
        %1511 = vmatpush1.bf16.msra.mxu0 0
        %1512 = vmatprep.subr.bf16.mxu0 0
        %1513 = vmatpush1.bf16.msra.mxu0 0
        %1514 = vmatprep.subr.bf16.mxu0 0
        %1515 = vmatpush1.bf16.msra.mxu0 0
        %1516 = vmatprep.subr.bf16.mxu0 0
        %1517 = vmatpush1.bf16.msra.mxu0 0
        %1518 = vmatprep.subr.bf16.mxu0 0
        %1519 = vmatpush1.bf16.msra.mxu0 0
        %1520 = vmatprep.subr.bf16.mxu0 0
        %1521 = vmatpush1.bf16.msra.mxu0 0
        %1522 = vmatprep.subr.bf16.mxu0 0
        %1523 = vmatpush1.bf16.msra.mxu0 0
        %1524 = vmatprep.subr.bf16.mxu0 0
        %1525 = vmatpush1.bf16.msra.mxu0 %v1508
        %1526 = vmatprep.subr.bf16.mxu0 0
        %1527 = vmatpush2.bf16.msra.mxu0 0
        %1528 = vmatprep.subr.bf16.mxu0 0
        %1529 = vmatpush2.bf16.msra.mxu0 0
        %1530 = vmatprep.subr.bf16.mxu0 0
        %1531 = vmatpush2.bf16.msra.mxu0 0
        %1532 = vmatprep.subr.bf16.mxu0 0
        %1533 = vmatpush2.bf16.msra.mxu0 0
        %1534 = vmatprep.subr.bf16.mxu0 0
        %1535 = vmatpush2.bf16.msra.mxu0 0
        %1536 = vmatprep.subr.bf16.mxu0 0
        %1537 = vmatpush2.bf16.msra.mxu0 0
        %1538 = vmatprep.subr.bf16.mxu0 0
        %1539 = vmatpush2.bf16.msra.mxu0 0
        %1540 = vmatprep.subr.bf16.mxu0 0
        %1541 = vmatpush2.bf16.msra.mxu0 0
        %1542 = vmatprep.mubr.bf16.mxu0 0
        %1543 = vmatmul.mubr.bf16.gmra.mxu0 %v1504
        %v1544 = vpop.f32.mrf.mxu0
        %v1545 = vadd.f32 0.0, %v1544
        %v1546 = vpop.f32.mrf.mxu0
        %v1547 = vpop.f32.mrf.mxu0
        %v1548 = vpop.f32.mrf.mxu0
        %1549 = vdwg.mxu0
        %v1551 = vsel %vm1042, %v1496, 0
        %v1554 = vsel %vm1506, %v1500, 0
        %1556 = vmatprep.subr.bf16.mxu0 0
        %1557 = vmatpush1.bf16.msra.mxu0 0
        %1558 = vmatprep.subr.bf16.mxu0 0
        %1559 = vmatpush1.bf16.msra.mxu0 0
        %1560 = vmatprep.subr.bf16.mxu0 0
        %1561 = vmatpush1.bf16.msra.mxu0 0
        %1562 = vmatprep.subr.bf16.mxu0 0
        %1563 = vmatpush1.bf16.msra.mxu0 0
        %1564 = vmatprep.subr.bf16.mxu0 0
        %1565 = vmatpush1.bf16.msra.mxu0 0
        %1566 = vmatprep.subr.bf16.mxu0 0
        %1567 = vmatpush1.bf16.msra.mxu0 0
        %1568 = vmatprep.subr.bf16.mxu0 0
        %1569 = vmatpush1.bf16.msra.mxu0 0
        %1570 = vmatprep.subr.bf16.mxu0 0
        %1571 = vmatpush1.bf16.msra.mxu0 %v1554
        %1572 = vmatprep.subr.bf16.mxu0 0
        %1573 = vmatpush2.bf16.msra.mxu0 0
        %1574 = vmatprep.subr.bf16.mxu0 0
        %1575 = vmatpush2.bf16.msra.mxu0 0
        %1576 = vmatprep.subr.bf16.mxu0 0
        %1577 = vmatpush2.bf16.msra.mxu0 0
        %1578 = vmatprep.subr.bf16.mxu0 0
        %1579 = vmatpush2.bf16.msra.mxu0 0
        %1580 = vmatprep.subr.bf16.mxu0 0
        %1581 = vmatpush2.bf16.msra.mxu0 0
        %1582 = vmatprep.subr.bf16.mxu0 0
        %1583 = vmatpush2.bf16.msra.mxu0 0
        %1584 = vmatprep.subr.bf16.mxu0 0
        %1585 = vmatpush2.bf16.msra.mxu0 0
        %1586 = vmatprep.subr.bf16.mxu0 0
        %1587 = vmatpush2.bf16.msra.mxu0 0
        %1588 = vmatprep.mubr.bf16.mxu0 0
        %1589 = vmatmul.mubr.bf16.gmra.mxu0 %v1551
        %v1590 = vpop.f32.mrf.mxu0
        %v1591 = vadd.f32 0.0, %v1590
        %v1592 = vpop.f32.mrf.mxu0
        %v1593 = vpop.f32.mrf.mxu0
        %v1594 = vpop.f32.mrf.mxu0
        %1595 = vdwg.mxu0
        %v1597 = vsel %vm1042, %v1497, 0
        %v1600 = vsel %vm1506, %v1501, 0
        %1602 = vmatprep.subr.bf16.mxu0 0
        %1603 = vmatpush1.bf16.msra.mxu0 0
        %1604 = vmatprep.subr.bf16.mxu0 0
        %1605 = vmatpush1.bf16.msra.mxu0 0
        %1606 = vmatprep.subr.bf16.mxu0 0
        %1607 = vmatpush1.bf16.msra.mxu0 0
        %1608 = vmatprep.subr.bf16.mxu0 0
        %1609 = vmatpush1.bf16.msra.mxu0 0
        %1610 = vmatprep.subr.bf16.mxu0 0
        %1611 = vmatpush1.bf16.msra.mxu0 0
        %1612 = vmatprep.subr.bf16.mxu0 0
        %1613 = vmatpush1.bf16.msra.mxu0 0
        %1614 = vmatprep.subr.bf16.mxu0 0
        %1615 = vmatpush1.bf16.msra.mxu0 0
        %1616 = vmatprep.subr.bf16.mxu0 0
        %1617 = vmatpush1.bf16.msra.mxu0 %v1600
        %1618 = vmatprep.subr.bf16.mxu0 0
        %1619 = vmatpush2.bf16.msra.mxu0 0
        %1620 = vmatprep.subr.bf16.mxu0 0
        %1621 = vmatpush2.bf16.msra.mxu0 0
        %1622 = vmatprep.subr.bf16.mxu0 0
        %1623 = vmatpush2.bf16.msra.mxu0 0
        %1624 = vmatprep.subr.bf16.mxu0 0
        %1625 = vmatpush2.bf16.msra.mxu0 0
        %1626 = vmatprep.subr.bf16.mxu0 0
        %1627 = vmatpush2.bf16.msra.mxu0 0
        %1628 = vmatprep.subr.bf16.mxu0 0
        %1629 = vmatpush2.bf16.msra.mxu0 0
        %1630 = vmatprep.subr.bf16.mxu0 0
        %1631 = vmatpush2.bf16.msra.mxu0 0
        %1632 = vmatprep.subr.bf16.mxu0 0
        %1633 = vmatpush2.bf16.msra.mxu0 0
        %1634 = vmatprep.mubr.bf16.mxu0 0
        %1635 = vmatmul.mubr.bf16.gmra.mxu0 %v1597
        %v1636 = vpop.f32.mrf.mxu0
        %v1637 = vadd.f32 0.0, %v1636
        %v1638 = vpop.f32.mrf.mxu0
        %v1639 = vpop.f32.mrf.mxu0
        %v1640 = vpop.f32.mrf.mxu0
        %1641 = vdwg.mxu0
        %v1643 = vsel %vm1042, %v1498, 0
        %v1646 = vsel %vm1506, %v1502, 0
        %1648 = vmatprep.subr.bf16.mxu0 0
        %1649 = vmatpush1.bf16.msra.mxu0 0
        %1650 = vmatprep.subr.bf16.mxu0 0
        %1651 = vmatpush1.bf16.msra.mxu0 0
        %1652 = vmatprep.subr.bf16.mxu0 0
        %1653 = vmatpush1.bf16.msra.mxu0 0
        %1654 = vmatprep.subr.bf16.mxu0 0
        %1655 = vmatpush1.bf16.msra.mxu0 0
        %1656 = vmatprep.subr.bf16.mxu0 0
        %1657 = vmatpush1.bf16.msra.mxu0 0
        %1658 = vmatprep.subr.bf16.mxu0 0
        %1659 = vmatpush1.bf16.msra.mxu0 0
        %1660 = vmatprep.subr.bf16.mxu0 0
        %1661 = vmatpush1.bf16.msra.mxu0 0
        %1662 = vmatprep.subr.bf16.mxu0 0
        %1663 = vmatpush1.bf16.msra.mxu0 %v1646
        %1664 = vmatprep.subr.bf16.mxu0 0
        %1665 = vmatpush2.bf16.msra.mxu0 0
        %1666 = vmatprep.subr.bf16.mxu0 0
        %1667 = vmatpush2.bf16.msra.mxu0 0
        %1668 = vmatprep.subr.bf16.mxu0 0
        %1669 = vmatpush2.bf16.msra.mxu0 0
        %1670 = vmatprep.subr.bf16.mxu0 0
        %1671 = vmatpush2.bf16.msra.mxu0 0
        %1672 = vmatprep.subr.bf16.mxu0 0
        %1673 = vmatpush2.bf16.msra.mxu0 0
        %1674 = vmatprep.subr.bf16.mxu0 0
        %1675 = vmatpush2.bf16.msra.mxu0 0
        %1676 = vmatprep.subr.bf16.mxu0 0
        %1677 = vmatpush2.bf16.msra.mxu0 0
        %1678 = vmatprep.subr.bf16.mxu0 0
        %1679 = vmatpush2.bf16.msra.mxu0 0
        %1680 = vmatprep.mubr.bf16.mxu0 0
        %1681 = vmatmul.mubr.bf16.gmra.mxu0 %v1643
        %v1682 = vpop.f32.mrf.mxu0
        %v1683 = vadd.f32 0.0, %v1682
        %v1684 = vpop.f32.mrf.mxu0
        %v1685 = vpop.f32.mrf.mxu0
        %v1686 = vpop.f32.mrf.mxu0
        %1687 = vdwg.mxu0
        %v1688 = vsel %vm925, %v1545, 0.0
        %v1689 = vsel %vm925, %v1591, 0.0
        %v1690 = vadd.f32 %v1688, %v1689
        %v1691 = vsel %vm925, %v1637, 0.0
        %v1692 = vadd.f32 %v1690, %v1691
        %v1693 = vsel %vm925, %v1683, 0.0
        %v1694 = vadd.f32 %v1692, %v1693
        %v1695 = vld [vmem:[#allocation13] sm:$0x1]
        %v1697 = vlaneseq
        %v1698 = vshrl.u32 %v1697, 7
        %v1699 = vsub.s32 0, %v1698
        %v1700 = vrot.slane %v1695, %v1699
        %v1702 = vadd.f32 %v1694, %v1700
        %v1703 = vadd.f32 %v633, %v1702
        %v1704 = vld [vmem:[#allocation15] sm:$0x1]
        %v1705 = vld [vmem:[%s10] sm:$0x1]
        %v1706 = vsel %vm925, %v1703, 0.0
        %1707 = vadd.xlane.f32.xlu0 %v1706
        %v1708 = vpop.xlane.xlu0 %1707
        %v1709 = vmul.f32 %v1708, %v929
        %v1710 = vsub.f32 %v1703, %v1709
        %v1711 = vmul.f32 %v1710, %v1710
        %v1712 = vsel %vm925, %v1711, 0.0
        %1713 = vadd.xlane.f32.xlu0 %v1712
        %v1714 = vpop.xlane.xlu0 %1713
        %v1715 = vmul.f32 %v1714, %v929
        %v1716 = vadd.f32 %v1715, 1e-06
        %v1717 = vrsqrt.pop %v1716
        %v1718 = vmul.f32 %v1710, %v1717
        %v1720 = vlaneseq
        %v1721 = vshrl.u32 %v1720, 7
        %v1722 = vsub.s32 0, %v1721
        %v1723 = vrot.slane %v1704, %v1722
        %v1725 = vmul.f32 %v1718, %v1723
        %v1727 = vlaneseq
        %v1728 = vshrl.u32 %v1727, 7
        %v1729 = vsub.s32 0, %v1728
        %v1730 = vrot.slane %v1705, %v1729
        %v1732 = vadd.f32 %v1725, %v1730
        %v1733 = vpack.c.bf16 %v1732, %v1732
        %v1734 = vld [vmem:[%s11] sm:$0xf]
        %v1735 = vld [vmem:[%s11 + $0x4] sm:$0xf]
        %v1736 = vld [vmem:[%s11 + $0x8] sm:$0xf]
        %v1737 = vld [vmem:[%s11 + $0xc] sm:$0xf]
        %v1738 = vld [vmem:[%s12] sm:$0x1]
        %v1740 = vlaneseq
        %v1741 = vshrl.u32 %v1740, 7
        %v1742 = vsub.s32 0, %v1741
        %v1743 = vrot.slane %v1738, %v1742
        %v1749 = vunpack.c.l.b16 %v1734
        %v1750 = vunpack.c.l.b16 %v1735
        %v1751 = vunpack.c.l.b16 %v1736
        %v1752 = vunpack.c.l.b16 %v1737
        %v1753 = vpack.c.b16 %v1750, %v1749
        %v1754 = vpack.c.b16 %v1752, %v1751
        %v1758 = vsel %vm925, %v1733, 0
        %1760 = vmatprep.subr.bf16.mxu0 0
        %1761 = vmatpush1.bf16.msra.mxu0 0
        %1762 = vmatprep.subr.bf16.mxu0 0
        %1763 = vmatpush1.bf16.msra.mxu0 0
        %1764 = vmatprep.subr.bf16.mxu0 0
        %1765 = vmatpush1.bf16.msra.mxu0 0
        %1766 = vmatprep.subr.bf16.mxu0 0
        %1767 = vmatpush1.bf16.msra.mxu0 0
        %1768 = vmatprep.subr.bf16.mxu0 0
        %1769 = vmatpush1.bf16.msra.mxu0 0
        %1770 = vmatprep.subr.bf16.mxu0 0
        %1771 = vmatpush1.bf16.msra.mxu0 0
        %1772 = vmatprep.subr.bf16.mxu0 0
        %1773 = vmatpush1.bf16.msra.mxu0 %v1754
        %1774 = vmatprep.subr.bf16.mxu0 0
        %1775 = vmatpush1.bf16.msra.mxu0 %v1753
        %1776 = vmatprep.subr.bf16.mxu0 0
        %1777 = vmatpush2.bf16.msra.mxu0 0
        %1778 = vmatprep.subr.bf16.mxu0 0
        %1779 = vmatpush2.bf16.msra.mxu0 0
        %1780 = vmatprep.subr.bf16.mxu0 0
        %1781 = vmatpush2.bf16.msra.mxu0 0
        %1782 = vmatprep.subr.bf16.mxu0 0
        %1783 = vmatpush2.bf16.msra.mxu0 0
        %1784 = vmatprep.subr.bf16.mxu0 0
        %1785 = vmatpush2.bf16.msra.mxu0 0
        %1786 = vmatprep.subr.bf16.mxu0 0
        %1787 = vmatpush2.bf16.msra.mxu0 0
        %1788 = vmatprep.subr.bf16.mxu0 0
        %1789 = vmatpush2.bf16.msra.mxu0 0
        %1790 = vmatprep.subr.bf16.mxu0 0
        %1791 = vmatpush2.bf16.msra.mxu0 0
        %1792 = vmatprep.mubr.bf16.mxu0 0
        %1793 = vmatmul.mubr.bf16.gmra.mxu0 %v1758
        %v1794 = vpop.f32.mrf.mxu0
        %v1795 = vadd.f32 %v1743, %v1794
        %v1796 = vpop.f32.mrf.mxu0
        %v1797 = vpop.f32.mrf.mxu0
        %v1798 = vpop.f32.mrf.mxu0
        %1799 = vdwg.mxu0
        %v1800 = vmul.f32 %v1795, 0.5
        %v1801 = vmul.f32 %v1795, 0.70710677
        %v1802 = verf.f32.pop %v1801
        %v1803 = vadd.f32 %v1802, 1.0
        %v1804 = vmul.f32 %v1800, %v1803
        %v1805 = vpack.c.bf16 %v1804, %v1804
        %v1806 = vld [vmem:[%s13] sm:$0xf]
        %v1807 = vld [vmem:[%s13 + $0x4] sm:$0xf]
        %v1808 = vld [vmem:[%s13 + $0x8] sm:$0xf]
        %v1809 = vld [vmem:[%s13 + $0xc] sm:$0xf]
        %v1810 = vld [vmem:[%s13 + $0x10] sm:$0xf]
        %v1811 = vld [vmem:[%s13 + $0x14] sm:$0xf]
        %v1812 = vld [vmem:[%s13 + $0x18] sm:$0xf]
        %v1813 = vld [vmem:[%s13 + $0x1c] sm:$0xf]
        %v1814 = vld [vmem:[%s13 + $0x20] sm:$0xf]
        %v1815 = vld [vmem:[%s13 + $0x24] sm:$0xf]
        %v1816 = vld [vmem:[%s13 + $0x28] sm:$0xf]
        %v1817 = vld [vmem:[%s13 + $0x2c] sm:$0xf]
        %v1818 = vld [vmem:[%s13 + $0x30] sm:$0xf]
        %v1819 = vld [vmem:[%s13 + $0x34] sm:$0xf]
        %v1820 = vld [vmem:[%s13 + $0x38] sm:$0xf]
        %v1821 = vld [vmem:[%s13 + $0x3c] sm:$0xf]
        %v1822 = vld [vmem:[%s14] sm:$0x1]
        %v1824 = vlaneseq
        %v1825 = vshrl.u32 %v1824, 7
        %v1826 = vsub.s32 0, %v1825
        %v1827 = vrot.slane %v1822, %v1826
        %v1845 = vunpack.c.l.b16 %v1806
        %v1846 = vunpack.c.l.b16 %v1807
        %v1847 = vunpack.c.l.b16 %v1808
        %v1848 = vunpack.c.l.b16 %v1809
        %v1849 = vunpack.c.l.b16 %v1810
        %v1850 = vunpack.c.l.b16 %v1811
        %v1851 = vunpack.c.l.b16 %v1812
        %v1852 = vunpack.c.l.b16 %v1813
        %v1853 = vunpack.c.l.b16 %v1814
        %v1854 = vunpack.c.l.b16 %v1815
        %v1855 = vunpack.c.l.b16 %v1816
        %v1856 = vunpack.c.l.b16 %v1817
        %v1857 = vunpack.c.l.b16 %v1818
        %v1858 = vunpack.c.l.b16 %v1819
        %v1859 = vunpack.c.l.b16 %v1820
        %v1860 = vunpack.c.l.b16 %v1821
        %v1861 = vpack.c.b16 %v1846, %v1845
        %v1862 = vpack.c.b16 %v1848, %v1847
        %v1863 = vpack.c.b16 %v1850, %v1849
        %v1864 = vpack.c.b16 %v1852, %v1851
        %v1865 = vpack.c.b16 %v1854, %v1853
        %v1866 = vpack.c.b16 %v1856, %v1855
        %v1867 = vpack.c.b16 %v1858, %v1857
        %v1868 = vpack.c.b16 %v1860, %v1859
        %1877 = vmatprep.subr.bf16.mxu0 0
        %1878 = vmatpush1.bf16.msra.mxu0 %v1868
        %1879 = vmatprep.subr.bf16.mxu0 0
        %1880 = vmatpush1.bf16.msra.mxu0 %v1867
        %1881 = vmatprep.subr.bf16.mxu0 0
        %1882 = vmatpush1.bf16.msra.mxu0 %v1866
        %1883 = vmatprep.subr.bf16.mxu0 0
        %1884 = vmatpush1.bf16.msra.mxu0 %v1865
        %1885 = vmatprep.subr.bf16.mxu0 0
        %1886 = vmatpush1.bf16.msra.mxu0 %v1864
        %1887 = vmatprep.subr.bf16.mxu0 0
        %1888 = vmatpush1.bf16.msra.mxu0 %v1863
        %1889 = vmatprep.subr.bf16.mxu0 0
        %1890 = vmatpush1.bf16.msra.mxu0 %v1862
        %1891 = vmatprep.subr.bf16.mxu0 0
        %1892 = vmatpush1.bf16.msra.mxu0 %v1861
        %1893 = vmatprep.subr.bf16.mxu0 0
        %1894 = vmatpush2.bf16.msra.mxu0 0
        %1895 = vmatprep.subr.bf16.mxu0 0
        %1896 = vmatpush2.bf16.msra.mxu0 0
        %1897 = vmatprep.subr.bf16.mxu0 0
        %1898 = vmatpush2.bf16.msra.mxu0 0
        %1899 = vmatprep.subr.bf16.mxu0 0
        %1900 = vmatpush2.bf16.msra.mxu0 0
        %1901 = vmatprep.subr.bf16.mxu0 0
        %1902 = vmatpush2.bf16.msra.mxu0 0
        %1903 = vmatprep.subr.bf16.mxu0 0
        %1904 = vmatpush2.bf16.msra.mxu0 0
        %1905 = vmatprep.subr.bf16.mxu0 0
        %1906 = vmatpush2.bf16.msra.mxu0 0
        %1907 = vmatprep.subr.bf16.mxu0 0
        %1908 = vmatpush2.bf16.msra.mxu0 0
        %1909 = vmatprep.mubr.bf16.mxu0 0
        %1910 = vmatmul.mubr.bf16.gmra.mxu0 %v1805
        %v1911 = vpop.f32.mrf.mxu0
        %v1912 = vadd.f32 %v1827, %v1911
        %v1913 = vpop.f32.mrf.mxu0
        %v1914 = vpop.f32.mrf.mxu0
        %v1915 = vpop.f32.mrf.mxu0
        %1916 = vdwg.mxu0
        %v1917 = vadd.f32 %v1703, %v1912
        %1918 = vst.msk [vmem:[%s618] sm:$0xff] %vm925, %v1917
        %s1919 = sand.u32 %s382, 1
        %s1920 = scalar_lea.sflag [#allocation6], %s1919
        %s1921 = sand.u32 %s382, 1
        %s1922 = smul.addr %s1921, 8
        %s1923 = scalar_lea.vmem [#allocation16], %s1922
        // Predicated region
        $region113: #{tpu_custom_call.1} parent=79 // pred_check
          %p1924 = pneg %p392
        $region114: #{tpu_custom_call.1} parent=79 // pred_check_branch
          %1926 = sbr.rel (%p1924) target = $region116
        $region115: #{tpu_custom_call.1} parent=79 // pred_region
          %s1928 = ssub.s32 128, 128
          %1929 = vsyncadd %s1920, %s1928
          %s1930 = smul.addr %s37, 2
          %s1931 = sadd.s32 %s38, %s1930
          %s1932 = smul.addr %s1931, 128
          %s1933 = scalar_lea.hbm %s15, %s1932
          %s1935 = sshll.u32 %s1923, 4
          %s1936 = int_to_ptr.vmem [resolvable:$true] %s1935
          %1938 = dma.vmem_to_hbm [thread:$0]  %s1936, 128, %s1933, %s1920
        $region116: #{tpu_custom_call.1} parent=79 // pred_fallthru
          _
      $region80: #{tpu_custom_call.1} parent=5 // pred_fallthru
        _
      %p1939 = scmp.le.s32.totalorder 2, %s28
      // Predicated region
      $region117: #{tpu_custom_call.1} parent=5 // pred_check
        %p1940 = pneg %p1939
      $region118: #{tpu_custom_call.1} parent=5 // pred_check_branch
        %1942 = sbr.rel (%p1940) target = $region120
      $region119: #{tpu_custom_call.1} parent=5 // pred_region
        %s1943 = ssub.s32 %s28, 2
        // Predicated region
        $region121: #{tpu_custom_call.1} parent=119 // pred_check
          %p1944 = pneg %p398
        $region122: #{tpu_custom_call.1} parent=119 // pred_check_branch
          %1946 = sbr.rel (%p1944) target = $region124
        $region123: #{tpu_custom_call.1} parent=119 // pred_region
          %s1947 = sand.u32 %s383, 1
          %s1948 = scalar_lea.sflag [#allocation6], %s1947
          %s1949 = sand.u32 %s383, 1
          %s1950 = smul.addr %s1949, 8
          %s1951 = scalar_lea.vmem [#allocation16], %s1950
          %1952 = dma.done %s1948, 128
        $region124: #{tpu_custom_call.1} parent=119 // pred_fallthru
          _
      $region120: #{tpu_custom_call.1} parent=5 // pred_fallthru
        _
    $region6: #{tpu_custom_call.1} parent=1 // loop_footer
      %s32 = sadd.s32 1, %s28
    $region7: #{tpu_custom_call.1} parent=1 // loop_footer_branch
      %27 = sbr.rel target = $region3
    $region8: #{tpu_custom_call.1} parent=1 // loop_exit
      _
    %1953 = vsyncpa [#allocation5], 1
    %s1954 = scalar_lea.sflag [#allocation5], 1
    %1955 = vsyncpa %s1954, 1
    %1956 = vsyncpa [#allocation8], 1
    %1957 = vsyncpa [#allocation11], 1
    %1958 = vsyncpa [#allocation14], 1
    %1959 = vsyncpa [#allocation6], 1
    %s1960 = scalar_lea.sflag [#allocation6], 1
    %1961 = vsyncpa %s1960, 1

</llo_original>
